<compile_context>
chip_gen: v6e
topology: v6e:2x2x1
jax: 0.10.0
libtpu: 0.0.40
codegen_flags: <defaults>
</compile_context>

<pallas_src>
import numpy as np
import jax
import jax.numpy as jnp
from jax import lax
from jax.experimental import pallas as pl
from jax.experimental.pallas import tpu as pltpu


# ----------------------------------------------------------------------------
# host-side operator construction (one-time, numpy)
# ----------------------------------------------------------------------------
def _interp_matrix(n_out, n_in):
    """1D bilinear interpolation matrix, align_corners=True (PyTorch)."""
    m = np.zeros((n_out, n_in), np.float32)
    if n_out == 1 or n_in == 1:
        m[:, 0] = 1.0
        return m
    scale = (n_in - 1) / (n_out - 1)
    for i in range(n_out):
        src = i * scale
        i0 = min(int(np.floor(src)), n_in - 1)
        frac = src - i0
        m[i, i0] += 1.0 - frac
        m[i, min(i0 + 1, n_in - 1)] += frac
    return m


def _band_conv_matrix(w, width):
    """Expand a 3x3 conv (padding=1) into 3 block-banded lane-contracting
    matrices, one per kernel row.

    w: (3, 3, Cin, Cout) -> (3, width*Cin, width*Cout) with
      out[dh][(x+dw-1)*Cin + ci, x*Cout + co] = w[dh, dw, ci, co]
    out-of-range taps are dropped, which implements zero padding along W.
    """
    w = np.asarray(w, np.float32)
    _, _, ci, co = w.shape
    out = np.zeros((3, width * ci, width * co), np.float32)
    for dh in range(3):
        for dw in range(3):
            for x in range(width):
                src = x + dw - 1
                if 0 <= src < width:
                    out[dh, src * ci:(src + 1) * ci,
                        x * co:(x + 1) * co] = w[dh, dw]
    return out


# ----------------------------------------------------------------------------
# kernel
# ----------------------------------------------------------------------------
def _make_up_kernel(nb, H2):
    stride = H2 + 1                 # rows per image incl. shared separator row
    m_out = nb * stride - 1         # stacked matmul M (valid + separator rows)

    def kernel(x1_ref, x2_ref, ah_ref, w1_ref, b1_ref, w2_ref, b2_ref,
               out_ref, pad1, padm):
        f32 = jnp.float32
        K1 = pad1.shape[1]          # W2*C2 + W1*C1
        WC2 = x2_ref.shape[2]       # W2*C2
        WCm = padm.shape[1]         # W2*Cmid

        # ---- zero the nb+1 halo/separator rows; interiors are overwritten ----
        for n in range(nb + 1):
            pad1[n * stride:n * stride + 1, :] = jnp.zeros((1, K1), pad1.dtype)

        # ---- stage skip connection + row-upsampled x1 per image -------------
        # (column upsample is folded into the conv1 weights on the host)
        for n in range(nb):
            r0 = n * stride + 1
            pad1[r0:r0 + H2, 0:WC2] = x2_ref[n]
            t = jnp.dot(ah_ref[...], x1_ref[n], preferred_element_type=f32)
            pad1[r0:r0 + H2, WC2:K1] = t.astype(pad1.dtype)

        # ---- conv1 (3x3, pad=1) + folded BN + ReLU over the whole strip -----
        acc = jnp.dot(pad1[0:m_out, :], w1_ref[0], preferred_element_type=f32)
        for dh in range(1, 3):
            acc = acc + jnp.dot(pad1[dh:dh + m_out, :], w1_ref[dh],
                                preferred_element_type=f32)
        hidden = jnp.maximum(acc + b1_ref[...], 0.0)

        # ---- stage hidden; rows landing on image separators get re-zeroed ---
        padm[1:1 + m_out, :] = hidden.astype(padm.dtype)
        for n in range(nb + 1):
            padm[n * stride:n * stride + 1, :] = jnp.zeros((1, WCm), padm.dtype)

        # ---- conv2 (3x3, pad=1) + folded BN + ReLU ---------------------------
        acc2 = jnp.dot(padm[0:m_out, :], w2_ref[0], preferred_element_type=f32)
        for dh in range(1, 3):
            acc2 = acc2 + jnp.dot(padm[dh:dh + m_out, :], w2_ref[dh],
                                  preferred_element_type=f32)
        y = jnp.maximum(acc2 + b2_ref[...], 0.0)

        # ---- drop separator rows when writing the output block --------------
        for n in range(nb):
            out_ref[n] = y[n * stride:n * stride + H2, :].astype(out_ref.dtype)

    return kernel


# ----------------------------------------------------------------------------
# wrapper
# ----------------------------------------------------------------------------
def up_forward(x1_nchw, x2_nchw, params):
    """Forward of Up(in_channels, out_channels, bilinear=True), inference BN."""
    w1, s1, b1, w2, s2, b2 = params
    N, C1, H1, W1 = x1_nchw.shape
    N2, C2, H2, W2 = x2_nchw.shape
    assert N == N2 and H2 == 2 * H1 and W2 == 2 * W1
    # TODO(synk): odd-size skip connections (F.pad path of the full UNet Up)
    # are not handled; this spec's Up assumes exact 2x shapes.
    Cmid = w1.shape[3]
    Cout = w2.shape[3]

    # --- one-time host prep: fold BN, band-expand, fold column upsample ------
    s1v = np.asarray(s1, np.float32).reshape(-1)
    s2v = np.asarray(s2, np.float32).reshape(-1)
    w1f = np.asarray(w1, np.float32) * s1v.reshape(1, 1, 1, Cmid)
    w2f = np.asarray(w2, np.float32) * s2v.reshape(1, 1, 1, Cout)
    w1a = _band_conv_matrix(w1f[:, :, :C2, :], W2)          # (3, W2*C2, W2*Cmid)
    w1b = _band_conv_matrix(w1f[:, :, C2:, :], W2)          # (3, W2*C1, W2*Cmid)
    mw = np.kron(_interp_matrix(W2, W1).T,
                 np.eye(C1, dtype=np.float32))              # (W1*C1, W2*C1)
    w1b = np.einsum('kc,dcn->dkn', mw, w1b)                 # fold col-upsample
    w1band = np.concatenate([w1a, w1b], axis=1)             # (3, K1, W2*Cmid)
    w2band = _band_conv_matrix(w2f, W2)                     # (3, W2*Cmid, W2*Cout)
    b1t = np.tile(np.asarray(b1, np.float32).reshape(-1), W2).reshape(1, -1)
    b2t = np.tile(np.asarray(b2, np.float32).reshape(-1), W2).reshape(1, -1)
    ah = _interp_matrix(H2, H1)                             # (H2, H1)

    K1 = W2 * C2 + W1 * C1
    WCm = W2 * Cmid
    WCo = W2 * Cout

    # --- batch strip size: fold images into the matmul M dimension -----------
    nb = 1
    for cand in range(1, N + 1):
        if N % cand == 0 and cand * (H2 + 1) + 1 <= 256:   # ~MXU height
            nb = cand
    if N // nb == 1 and N >= 4 and N % 2 == 0:
        nb = N // 2        # keep >=2 grid steps for megacore on bigger batches
    grid = (N // nb,)
    stride = H2 + 1
    rows = nb * stride + 1

    bf16 = jnp.bfloat16
    # lane-dense activation layout: NCHW -> (N, H, W*C), bf16
    x1l = jnp.transpose(x1_nchw, (0, 2, 3, 1)).reshape(N, H1, W1 * C1).astype(bf16)
    x2l = jnp.transpose(x2_nchw, (0, 2, 3, 1)).reshape(N, H2, W2 * C2).astype(bf16)

    ah_d = jnp.asarray(ah, bf16)
    w1_d = jnp.asarray(w1band, bf16)
    w2_d = jnp.asarray(w2band, bf16)
    b1_d = jnp.asarray(b1t, jnp.float32)
    b2_d = jnp.asarray(b2t, jnp.float32)

    def const_spec(shape, index_map, single_buffer):
        # grid-invariant operands: no re-fetch -> single buffer (VMEM saving)
        if single_buffer:
            try:
                return pl.BlockSpec(shape, index_map, pipeline_mode=pl.Buffered(1))
            except (AttributeError, TypeError):
                pass
        return pl.BlockSpec(shape, index_map)

    # rough VMEM budget: double-buffered activations/output + weights + scratch,
    # with a 2x margin for (8,128)/(16,128) tile padding.
    need = 2 * (
        2 * (nb * H1 * W1 * C1 + nb * H2 * W2 * C2) * 2
        + (H2 * H1 + 3 * K1 * WCm + 3 * WCm * WCo) * 2 * 2
        + (WCm + WCo) * 4 * 2
        + 2 * nb * H2 * WCo * 4
        + (rows * K1 + rows * WCm) * 2
    )
    # stay well under v7x's 64 MiB physical VMEM at small/medium shapes
    vmem_limit = int(min(48 * 1024 * 1024, max(32 * 1024 * 1024, need)))

    def run(single_buffer):
        in_specs = [
            pl.BlockSpec((nb, H1, W1 * C1), lambda g: (g, 0, 0)),
            pl.BlockSpec((nb, H2, W2 * C2), lambda g: (g, 0, 0)),
            const_spec((H2, H1), lambda g: (0, 0), single_buffer),
            const_spec((3, K1, WCm), lambda g: (0, 0, 0), single_buffer),
            const_spec((1, WCm), lambda g: (0, 0), single_buffer),
            const_spec((3, WCm, WCo), lambda g: (0, 0, 0), single_buffer),
            const_spec((1, WCo), lambda g: (0, 0), single_buffer),
        ]
        out_specs = pl.BlockSpec((nb, H2, WCo), lambda g: (g, 0, 0))
        out = pl.pallas_call(
            _make_up_kernel(nb, H2),
            out_shape=jax.ShapeDtypeStruct((N, H2, WCo), jnp.float32),
            grid_spec=pltpu.PrefetchScalarGridSpec(
                num_scalar_prefetch=0,
                grid=grid,
                in_specs=in_specs,
                out_specs=out_specs,
                scratch_shapes=[
                    pltpu.VMEM((rows, K1), bf16),    # padded stacked concat input
                    pltpu.VMEM((rows, WCm), bf16),   # padded stacked conv1 output
                ],
            ),
            compiler_params=pltpu.CompilerParams(
                dimension_semantics=("parallel",),
                vmem_limit_bytes=vmem_limit,
            ),
        )(x1l, x2l, ah_d, w1_d, b1_d, w2_d, b2_d)
        return jax.block_until_ready(out)

    try:
        y2d = run(True)
    except Exception:
        # this Pallas build does not accept pipeline_mode / Buffered(1);
        # fall back to default double-buffering (identical numerics).
        y2d = run(False)

    # (N, H2, W2*Cout) -> (N, Cout, H2, W2) to match PyTorch's convention
    return jnp.transpose(y2d.reshape(N, H2, W2, Cout), (0, 3, 1, 2))


# ----------------------------------------------------------------------------
# synthetic parameters + pure-JAX reference (self-check)
# ----------------------------------------------------------------------------
def make_params(key, in_channels, out_channels):
    """Deterministic synthetic parameters matching Up(in_ch, out_ch)."""
    mid_channels = in_channels // 2
    eps = 1e-5
    ks = jax.random.split(key, 10)

    def conv_w(k, cin, cout):
        # stored as (kh, kw, cin, cout)
        return 0.1 * jax.random.normal(k, (3, 3, cin, cout), jnp.float32)

    def bn_fold(kg, kb, km, kv, c):
        gamma = 1.0 + 0.1 * jax.random.normal(kg, (c,), jnp.float32)
        beta = 0.1 * jax.random.normal(kb, (c,), jnp.float32)
        rmean = 0.1 * jax.random.normal(km, (c,), jnp.float32)
        rvar = jax.random.uniform(kv, (c,), jnp.float32, 0.5, 1.5)
        scale = gamma / jnp.sqrt(rvar + eps)
        bias = beta - rmean * scale
        return scale.reshape(1, c), bias.reshape(1, c)

    w1 = conv_w(ks[0], in_channels, mid_channels)
    s1, b1 = bn_fold(ks[1], ks[2], ks[3], ks[4], mid_channels)
    w2 = conv_w(ks[5], mid_channels, out_channels)
    s2, b2 = bn_fold(ks[6], ks[7], ks[8], ks[9], out_channels)
    return (w1, s1, b1, w2, s2, b2)


def up_reference(x1_nchw, x2_nchw, params):
    """Plain-JAX (XLA, f32) reference of the same forward pass."""
    w1, s1, b1, w2, s2, b2 = params
    _, _, H1, W1 = x1_nchw.shape
    H2, W2 = 2 * H1, 2 * W1
    ah = jnp.asarray(_interp_matrix(H2, H1))
    aw = jnp.asarray(_interp_matrix(W2, W1))
    up = jnp.einsum('ih,nchw->nciw', ah, x1_nchw,
                    precision=lax.Precision.HIGHEST)
    up = jnp.einsum('jw,nciw->ncij', aw, up,
                    precision=lax.Precision.HIGHEST)
    x = jnp.concatenate([x2_nchw, up], axis=1)

    def conv_bn_relu(x, w, s, b):
        w_oihw = jnp.transpose(w, (3, 2, 0, 1))
        y = lax.conv_general_dilated(
            x, w_oihw, (1, 1), ((1, 1), (1, 1)),
            dimension_numbers=('NCHW', 'OIHW', 'NCHW'),
            precision=lax.Precision.HIGHEST)
        y = y * s.reshape(1, -1, 1, 1) + b.reshape(1, -1, 1, 1)
        return jnp.maximum(y, 0.0)

    x = conv_bn_relu(x, w1, s1, b1)
    return conv_bn_relu(x, w2, s2, b2)


if __name__ == "__main__":
    # Up(in_channels=8, out_channels=4, bilinear=True)
    # x1: low-res feature map (N, in_ch//2, H1, W1); x2: skip (N, in_ch//2, 2H1, 2W1)
    in_channels, out_channels = 8, 4
    N, H1, W1 = 2, 8, 8

    key = jax.random.PRNGKey(0)
    k1, k2, kp = jax.random.split(key, 3)
    x1 = jax.random.normal(k1, (N, in_channels // 2, H1, W1), jnp.float32)
    x2 = jax.random.normal(k2, (N, in_channels // 2, 2 * H1, 2 * W1),
                           jnp.float32)
    params = make_params(kp, in_channels, out_channels)

    y = jax.block_until_ready(up_forward(x1, x2, params))

    assert y.shape == (N, out_channels, 2 * H1, 2 * W1), y.shape
    assert bool(jnp.all(jnp.isfinite(y)))
    assert bool(jnp.all(y >= 0.0))  # final ReLU

    y_ref = jax.block_until_ready(up_reference(x1, x2, params))
    err = float(jnp.max(jnp.abs(y - y_ref)))
    # bf16 activations/weights with f32 accumulation vs a pure-f32 reference:
    # tolerance scaled to the output magnitude.
    tol = 5e-2 * max(1.0, float(jnp.max(jnp.abs(y_ref))))
    assert err < tol, f"mismatch vs reference: max abs err {err} (tol {tol})"

    print("KERNEL_OK")
</pallas_src>

<mosaic_0001>
module attributes {stable_mosaic.version = 11 : i64} {
  func.func @kernel(%arg0: i32, %arg1: memref<2x8x32xbf16, #tpu.memory_space<vmem>>, %arg2: memref<2x16x64xbf16, #tpu.memory_space<vmem>>, %arg3: memref<16x8xbf16, #tpu.memory_space<vmem>>, %arg4: memref<3x96x64xbf16, #tpu.memory_space<vmem>>, %arg5: memref<1x64xf32, #tpu.memory_space<vmem>>, %arg6: memref<3x64x64xbf16, #tpu.memory_space<vmem>>, %arg7: memref<1x64xf32, #tpu.memory_space<vmem>>, %arg8: memref<2x16x64xf32, #tpu.memory_space<vmem>>, %arg9: memref<35x96xbf16, #tpu.memory_space<vmem>>, %arg10: memref<35x64xbf16, #tpu.memory_space<vmem>>) attributes {dimension_semantics = [#tpu.dimension_semantics<parallel>], iteration_bounds = array<i64: 1>, scalar_prefetch = 0 : i64, scratch_operands = 2 : i64, tpu.core_type = #tpu.core_type<tc>, window_params = [{transform_indices = @transform_0, window_bounds = array<i64: 2, 8, 32>}, {transform_indices = @transform_1, window_bounds = array<i64: 2, 16, 64>}, {pipeline_mode = #tpu.pipeline_mode<synchronous>, transform_indices = @transform_2, window_bounds = array<i64: 16, 8>}, {pipeline_mode = #tpu.pipeline_mode<synchronous>, transform_indices = @transform_3, window_bounds = array<i64: 3, 96, 64>}, {pipeline_mode = #tpu.pipeline_mode<synchronous>, transform_indices = @transform_4, window_bounds = array<i64: 1, 64>}, {pipeline_mode = #tpu.pipeline_mode<synchronous>, transform_indices = @transform_5, window_bounds = array<i64: 3, 64, 64>}, {pipeline_mode = #tpu.pipeline_mode<synchronous>, transform_indices = @transform_6, window_bounds = array<i64: 1, 64>}, {transform_indices = @transform_7, window_bounds = array<i64: 2, 16, 64>}]} {
    %cst = arith.constant 0.000000e+00 : bf16
    %0 = vector.broadcast %cst : bf16 to vector<1x96xbf16>
    %c0 = arith.constant 0 : index
    %c0_0 = arith.constant 0 : index
    %1 = vector.load %arg9[%c0, %c0_0] : memref<35x96xbf16, #tpu.memory_space<vmem>>, vector<1x96xbf16>
    tpu.vector_store %arg9[%c0, %c0_0], %0 {strides = array<i32>} : memref<35x96xbf16, #tpu.memory_space<vmem>>, vector<1x96xbf16>,
    %cst_1 = arith.constant 0.000000e+00 : bf16
    %2 = vector.broadcast %cst_1 : bf16 to vector<1x96xbf16>
    %c17 = arith.constant 17 : index
    %c0_2 = arith.constant 0 : index
    %3 = vector.load %arg9[%c17, %c0_2] : memref<35x96xbf16, #tpu.memory_space<vmem>>, vector<1x96xbf16>
    tpu.vector_store %arg9[%c17, %c0_2], %2 {strides = array<i32>} : memref<35x96xbf16, #tpu.memory_space<vmem>>, vector<1x96xbf16>,
    %cst_3 = arith.constant 0.000000e+00 : bf16
    %4 = vector.broadcast %cst_3 : bf16 to vector<1x96xbf16>
    %c34 = arith.constant 34 : index
    %c0_4 = arith.constant 0 : index
    %5 = vector.load %arg9[%c34, %c0_4] : memref<35x96xbf16, #tpu.memory_space<vmem>>, vector<1x96xbf16>
    tpu.vector_store %arg9[%c34, %c0_4], %4 {strides = array<i32>} : memref<35x96xbf16, #tpu.memory_space<vmem>>, vector<1x96xbf16>,
    %c0_5 = arith.constant 0 : index
    %c0_6 = arith.constant 0 : index
    %c0_7 = arith.constant 0 : index
    %6 = vector.load %arg2[%c0_5, %c0_6, %c0_7] : memref<2x16x64xbf16, #tpu.memory_space<vmem>>, vector<1x16x64xbf16>
    %7 = vector.shape_cast %6 : vector<1x16x64xbf16> to vector<16x64xbf16>
    %c1 = arith.constant 1 : index
    %c0_8 = arith.constant 0 : index
    %8 = vector.load %arg9[%c1, %c0_8] : memref<35x96xbf16, #tpu.memory_space<vmem>>, vector<16x64xbf16>
    tpu.vector_store %arg9[%c1, %c0_8], %7 {strides = array<i32>} : memref<35x96xbf16, #tpu.memory_space<vmem>>, vector<16x64xbf16>,
    %c0_9 = arith.constant 0 : index
    %c0_10 = arith.constant 0 : index
    %9 = vector.load %arg3[%c0_9, %c0_10] : memref<16x8xbf16, #tpu.memory_space<vmem>>, vector<16x8xbf16>
    %c0_11 = arith.constant 0 : index
    %c0_12 = arith.constant 0 : index
    %c0_13 = arith.constant 0 : index
    %10 = vector.load %arg1[%c0_11, %c0_12, %c0_13] : memref<2x8x32xbf16, #tpu.memory_space<vmem>>, vector<1x8x32xbf16>
    %11 = vector.shape_cast %10 : vector<1x8x32xbf16> to vector<8x32xbf16>
    %cst_14 = arith.constant dense<0.000000e+00> : vector<16x32xf32>
    %12 = tpu.matmul %9, %11, %cst_14 {dimension_numbers = #tpu.dot_dimension_numbers<[1], [0], [0], [1], [0, 0, 1, 1], [], []>} : vector<16x8xbf16>, vector<8x32xbf16>, vector<16x32xf32> -> vector<16x32xf32>
    %13 = arith.truncf %12 : vector<16x32xf32> to vector<16x32xbf16>
    %c1_15 = arith.constant 1 : index
    %c64 = arith.constant 64 : index
    %14 = vector.load %arg9[%c1_15, %c64] : memref<35x96xbf16, #tpu.memory_space<vmem>>, vector<16x32xbf16>
    tpu.vector_store %arg9[%c1_15, %c64], %13 {strides = array<i32>} : memref<35x96xbf16, #tpu.memory_space<vmem>>, vector<16x32xbf16>,
    %c1_16 = arith.constant 1 : index
    %c0_17 = arith.constant 0 : index
    %c0_18 = arith.constant 0 : index
    %15 = vector.load %arg2[%c1_16, %c0_17, %c0_18] : memref<2x16x64xbf16, #tpu.memory_space<vmem>>, vector<1x16x64xbf16>
    %16 = vector.shape_cast %15 : vector<1x16x64xbf16> to vector<16x64xbf16>
    %c18 = arith.constant 18 : index
    %c0_19 = arith.constant 0 : index
    %17 = vector.load %arg9[%c18, %c0_19] : memref<35x96xbf16, #tpu.memory_space<vmem>>, vector<16x64xbf16>
    tpu.vector_store %arg9[%c18, %c0_19], %16 {strides = array<i32>} : memref<35x96xbf16, #tpu.memory_space<vmem>>, vector<16x64xbf16>,
    %c0_20 = arith.constant 0 : index
    %c0_21 = arith.constant 0 : index
    %18 = vector.load %arg3[%c0_20, %c0_21] : memref<16x8xbf16, #tpu.memory_space<vmem>>, vector<16x8xbf16>
    %c1_22 = arith.constant 1 : index
    %c0_23 = arith.constant 0 : index
    %c0_24 = arith.constant 0 : index
    %19 = vector.load %arg1[%c1_22, %c0_23, %c0_24] : memref<2x8x32xbf16, #tpu.memory_space<vmem>>, vector<1x8x32xbf16>
    %20 = vector.shape_cast %19 : vector<1x8x32xbf16> to vector<8x32xbf16>
    %cst_25 = arith.constant dense<0.000000e+00> : vector<16x32xf32>
    %21 = tpu.matmul %18, %20, %cst_25 {dimension_numbers = #tpu.dot_dimension_numbers<[1], [0], [0], [1], [0, 0, 1, 1], [], []>} : vector<16x8xbf16>, vector<8x32xbf16>, vector<16x32xf32> -> vector<16x32xf32>
    %22 = arith.truncf %21 : vector<16x32xf32> to vector<16x32xbf16>
    %c18_26 = arith.constant 18 : index
    %c64_27 = arith.constant 64 : index
    %23 = vector.load %arg9[%c18_26, %c64_27] : memref<35x96xbf16, #tpu.memory_space<vmem>>, vector<16x32xbf16>
    tpu.vector_store %arg9[%c18_26, %c64_27], %22 {strides = array<i32>} : memref<35x96xbf16, #tpu.memory_space<vmem>>, vector<16x32xbf16>,
    %c0_28 = arith.constant 0 : index
    %c0_29 = arith.constant 0 : index
    %24 = vector.load %arg9[%c0_28, %c0_29] : memref<35x96xbf16, #tpu.memory_space<vmem>>, vector<33x96xbf16>
    %c0_30 = arith.constant 0 : index
    %c0_31 = arith.constant 0 : index
    %c0_32 = arith.constant 0 : index
    %25 = vector.load %arg4[%c0_30, %c0_31, %c0_32] : memref<3x96x64xbf16, #tpu.memory_space<vmem>>, vector<1x96x64xbf16>
    %26 = vector.shape_cast %25 : vector<1x96x64xbf16> to vector<96x64xbf16>
    %cst_33 = arith.constant dense<0.000000e+00> : vector<33x64xf32>
    %27 = tpu.matmul %24, %26, %cst_33 {dimension_numbers = #tpu.dot_dimension_numbers<[1], [0], [0], [1], [0, 0, 1, 1], [], []>} : vector<33x96xbf16>, vector<96x64xbf16>, vector<33x64xf32> -> vector<33x64xf32>
    %c1_34 = arith.constant 1 : index
    %c0_35 = arith.constant 0 : index
    %28 = vector.load %arg9[%c1_34, %c0_35] : memref<35x96xbf16, #tpu.memory_space<vmem>>, vector<33x96xbf16>
    %c1_36 = arith.constant 1 : index
    %c0_37 = arith.constant 0 : index
    %c0_38 = arith.constant 0 : index
    %29 = vector.load %arg4[%c1_36, %c0_37, %c0_38] : memref<3x96x64xbf16, #tpu.memory_space<vmem>>, vector<1x96x64xbf16>
    %30 = vector.shape_cast %29 : vector<1x96x64xbf16> to vector<96x64xbf16>
    %cst_39 = arith.constant dense<0.000000e+00> : vector<33x64xf32>
    %31 = tpu.matmul %28, %30, %cst_39 {dimension_numbers = #tpu.dot_dimension_numbers<[1], [0], [0], [1], [0, 0, 1, 1], [], []>} : vector<33x96xbf16>, vector<96x64xbf16>, vector<33x64xf32> -> vector<33x64xf32>
    %32 = arith.addf %27, %31 : vector<33x64xf32>
    %c2 = arith.constant 2 : index
    %c0_40 = arith.constant 0 : index
    %33 = vector.load %arg9[%c2, %c0_40] : memref<35x96xbf16, #tpu.memory_space<vmem>>, vector<33x96xbf16>
    %c2_41 = arith.constant 2 : index
    %c0_42 = arith.constant 0 : index
    %c0_43 = arith.constant 0 : index
    %34 = vector.load %arg4[%c2_41, %c0_42, %c0_43] : memref<3x96x64xbf16, #tpu.memory_space<vmem>>, vector<1x96x64xbf16>
    %35 = vector.shape_cast %34 : vector<1x96x64xbf16> to vector<96x64xbf16>
    %cst_44 = arith.constant dense<0.000000e+00> : vector<33x64xf32>
    %36 = tpu.matmul %33, %35, %cst_44 {dimension_numbers = #tpu.dot_dimension_numbers<[1], [0], [0], [1], [0, 0, 1, 1], [], []>} : vector<33x96xbf16>, vector<96x64xbf16>, vector<33x64xf32> -> vector<33x64xf32>
    %37 = arith.addf %32, %36 : vector<33x64xf32>
    %c0_45 = arith.constant 0 : index
    %c0_46 = arith.constant 0 : index
    %38 = vector.load %arg5[%c0_45, %c0_46] : memref<1x64xf32, #tpu.memory_space<vmem>>, vector<1x64xf32>
    %39 = vector.broadcast %38 : vector<1x64xf32> to vector<33x64xf32>
    %40 = arith.addf %37, %39 : vector<33x64xf32>
    %cst_47 = arith.constant 0.000000e+00 : f32
    %41 = vector.broadcast %cst_47 : f32 to vector<33x64xf32>
    %42 = arith.maximumf %40, %41 : vector<33x64xf32>
    %43 = arith.truncf %42 : vector<33x64xf32> to vector<33x64xbf16>
    %c1_48 = arith.constant 1 : index
    %c0_49 = arith.constant 0 : index
    %44 = vector.load %arg10[%c1_48, %c0_49] : memref<35x64xbf16, #tpu.memory_space<vmem>>, vector<33x64xbf16>
    tpu.vector_store %arg10[%c1_48, %c0_49], %43 {strides = array<i32>} : memref<35x64xbf16, #tpu.memory_space<vmem>>, vector<33x64xbf16>,
    %cst_50 = arith.constant 0.000000e+00 : bf16
    %45 = vector.broadcast %cst_50 : bf16 to vector<1x64xbf16>
    %c0_51 = arith.constant 0 : index
    %c0_52 = arith.constant 0 : index
    %46 = vector.load %arg10[%c0_51, %c0_52] : memref<35x64xbf16, #tpu.memory_space<vmem>>, vector<1x64xbf16>
    tpu.vector_store %arg10[%c0_51, %c0_52], %45 {strides = array<i32>} : memref<35x64xbf16, #tpu.memory_space<vmem>>, vector<1x64xbf16>,
    %cst_53 = arith.constant 0.000000e+00 : bf16
    %47 = vector.broadcast %cst_53 : bf16 to vector<1x64xbf16>
    %c17_54 = arith.constant 17 : index
    %c0_55 = arith.constant 0 : index
    %48 = vector.load %arg10[%c17_54, %c0_55] : memref<35x64xbf16, #tpu.memory_space<vmem>>, vector<1x64xbf16>
    tpu.vector_store %arg10[%c17_54, %c0_55], %47 {strides = array<i32>} : memref<35x64xbf16, #tpu.memory_space<vmem>>, vector<1x64xbf16>,
    %cst_56 = arith.constant 0.000000e+00 : bf16
    %49 = vector.broadcast %cst_56 : bf16 to vector<1x64xbf16>
    %c34_57 = arith.constant 34 : index
    %c0_58 = arith.constant 0 : index
    %50 = vector.load %arg10[%c34_57, %c0_58] : memref<35x64xbf16, #tpu.memory_space<vmem>>, vector<1x64xbf16>
    tpu.vector_store %arg10[%c34_57, %c0_58], %49 {strides = array<i32>} : memref<35x64xbf16, #tpu.memory_space<vmem>>, vector<1x64xbf16>,
    %c0_59 = arith.constant 0 : index
    %c0_60 = arith.constant 0 : index
    %51 = vector.load %arg10[%c0_59, %c0_60] : memref<35x64xbf16, #tpu.memory_space<vmem>>, vector<33x64xbf16>
    %c0_61 = arith.constant 0 : index
    %c0_62 = arith.constant 0 : index
    %c0_63 = arith.constant 0 : index
    %52 = vector.load %arg6[%c0_61, %c0_62, %c0_63] : memref<3x64x64xbf16, #tpu.memory_space<vmem>>, vector<1x64x64xbf16>
    %53 = vector.shape_cast %52 : vector<1x64x64xbf16> to vector<64x64xbf16>
    %cst_64 = arith.constant dense<0.000000e+00> : vector<33x64xf32>
    %54 = tpu.matmul %51, %53, %cst_64 {dimension_numbers = #tpu.dot_dimension_numbers<[1], [0], [0], [1], [0, 0, 1, 1], [], []>} : vector<33x64xbf16>, vector<64x64xbf16>, vector<33x64xf32> -> vector<33x64xf32>
    %c1_65 = arith.constant 1 : index
    %c0_66 = arith.constant 0 : index
    %55 = vector.load %arg10[%c1_65, %c0_66] : memref<35x64xbf16, #tpu.memory_space<vmem>>, vector<33x64xbf16>
    %c1_67 = arith.constant 1 : index
    %c0_68 = arith.constant 0 : index
    %c0_69 = arith.constant 0 : index
    %56 = vector.load %arg6[%c1_67, %c0_68, %c0_69] : memref<3x64x64xbf16, #tpu.memory_space<vmem>>, vector<1x64x64xbf16>
    %57 = vector.shape_cast %56 : vector<1x64x64xbf16> to vector<64x64xbf16>
    %cst_70 = arith.constant dense<0.000000e+00> : vector<33x64xf32>
    %58 = tpu.matmul %55, %57, %cst_70 {dimension_numbers = #tpu.dot_dimension_numbers<[1], [0], [0], [1], [0, 0, 1, 1], [], []>} : vector<33x64xbf16>, vector<64x64xbf16>, vector<33x64xf32> -> vector<33x64xf32>
    %59 = arith.addf %54, %58 : vector<33x64xf32>
    %c2_71 = arith.constant 2 : index
    %c0_72 = arith.constant 0 : index
    %60 = vector.load %arg10[%c2_71, %c0_72] : memref<35x64xbf16, #tpu.memory_space<vmem>>, vector<33x64xbf16>
    %c2_73 = arith.constant 2 : index
    %c0_74 = arith.constant 0 : index
    %c0_75 = arith.constant 0 : index
    %61 = vector.load %arg6[%c2_73, %c0_74, %c0_75] : memref<3x64x64xbf16, #tpu.memory_space<vmem>>, vector<1x64x64xbf16>
    %62 = vector.shape_cast %61 : vector<1x64x64xbf16> to vector<64x64xbf16>
    %cst_76 = arith.constant dense<0.000000e+00> : vector<33x64xf32>
    %63 = tpu.matmul %60, %62, %cst_76 {dimension_numbers = #tpu.dot_dimension_numbers<[1], [0], [0], [1], [0, 0, 1, 1], [], []>} : vector<33x64xbf16>, vector<64x64xbf16>, vector<33x64xf32> -> vector<33x64xf32>
    %64 = arith.addf %59, %63 : vector<33x64xf32>
    %c0_77 = arith.constant 0 : index
    %c0_78 = arith.constant 0 : index
    %65 = vector.load %arg7[%c0_77, %c0_78] : memref<1x64xf32, #tpu.memory_space<vmem>>, vector<1x64xf32>
    %66 = vector.broadcast %65 : vector<1x64xf32> to vector<33x64xf32>
    %67 = arith.addf %64, %66 : vector<33x64xf32>
    %cst_79 = arith.constant 0.000000e+00 : f32
    %68 = vector.broadcast %cst_79 : f32 to vector<33x64xf32>
    %69 = arith.maximumf %67, %68 : vector<33x64xf32>
    %70 = vector.extract_strided_slice %69 {offsets = [0, 0], sizes = [16, 64], strides = [1, 1]} : vector<33x64xf32> to vector<16x64xf32>
    %c0_80 = arith.constant 0 : index
    %c0_81 = arith.constant 0 : index
    %c0_82 = arith.constant 0 : index
    %71 = vector.load %arg8[%c0_80, %c0_81, %c0_82] : memref<2x16x64xf32, #tpu.memory_space<vmem>>, vector<1x16x64xf32>
    %72 = vector.shape_cast %71 : vector<1x16x64xf32> to vector<16x64xf32>
    %73 = vector.shape_cast %70 : vector<16x64xf32> to vector<1x16x64xf32>
    tpu.vector_store %arg8[%c0_80, %c0_81, %c0_82], %73 {strides = array<i32>} : memref<2x16x64xf32, #tpu.memory_space<vmem>>, vector<1x16x64xf32>,
    %74 = vector.extract_strided_slice %69 {offsets = [17, 0], sizes = [16, 64], strides = [1, 1]} : vector<33x64xf32> to vector<16x64xf32>
    %c1_83 = arith.constant 1 : index
    %c0_84 = arith.constant 0 : index
    %c0_85 = arith.constant 0 : index
    %75 = vector.load %arg8[%c1_83, %c0_84, %c0_85] : memref<2x16x64xf32, #tpu.memory_space<vmem>>, vector<1x16x64xf32>
    %76 = vector.shape_cast %75 : vector<1x16x64xf32> to vector<16x64xf32>
    %77 = vector.shape_cast %74 : vector<16x64xf32> to vector<1x16x64xf32>
    tpu.vector_store %arg8[%c1_83, %c0_84, %c0_85], %77 {strides = array<i32>} : memref<2x16x64xf32, #tpu.memory_space<vmem>>, vector<1x16x64xf32>,
    return
  }
  func.func @transform_0(%arg0: i32) -> (i32, i32, i32) {
    %c0_i32 = arith.constant 0 : i32
    %c0_i32_0 = arith.constant 0 : i32
    %c0_i32_1 = arith.constant 0 : i32
    return %arg0, %c0_i32, %c0_i32_0 : i32, i32, i32
  }
  func.func @transform_1(%arg0: i32) -> (i32, i32, i32) {
    %c0_i32 = arith.constant 0 : i32
    %c0_i32_0 = arith.constant 0 : i32
    %c0_i32_1 = arith.constant 0 : i32
    return %arg0, %c0_i32, %c0_i32_0 : i32, i32, i32
  }
  func.func @transform_2(%arg0: i32) -> (i32, i32) {
    %c0_i32 = arith.constant 0 : i32
    %c0_i32_0 = arith.constant 0 : i32
    %c0_i32_1 = arith.constant 0 : i32
    return %c0_i32, %c0_i32_0 : i32, i32
  }
  func.func @transform_3(%arg0: i32) -> (i32, i32, i32) {
    %c0_i32 = arith.constant 0 : i32
    %c0_i32_0 = arith.constant 0 : i32
    %c0_i32_1 = arith.constant 0 : i32
    %c0_i32_2 = arith.constant 0 : i32
    return %c0_i32, %c0_i32_0, %c0_i32_1 : i32, i32, i32
  }
  func.func @transform_4(%arg0: i32) -> (i32, i32) {
    %c0_i32 = arith.constant 0 : i32
    %c0_i32_0 = arith.constant 0 : i32
    %c0_i32_1 = arith.constant 0 : i32
    return %c0_i32, %c0_i32_0 : i32, i32
  }
  func.func @transform_5(%arg0: i32) -> (i32, i32, i32) {
    %c0_i32 = arith.constant 0 : i32
    %c0_i32_0 = arith.constant 0 : i32
    %c0_i32_1 = arith.constant 0 : i32
    %c0_i32_2 = arith.constant 0 : i32
    return %c0_i32, %c0_i32_0, %c0_i32_1 : i32, i32, i32
  }
  func.func @transform_6(%arg0: i32) -> (i32, i32) {
    %c0_i32 = arith.constant 0 : i32
    %c0_i32_0 = arith.constant 0 : i32
    %c0_i32_1 = arith.constant 0 : i32
    return %c0_i32, %c0_i32_0 : i32, i32
  }
  func.func @transform_7(%arg0: i32) -> (i32, i32, i32) {
    %c0_i32 = arith.constant 0 : i32
    %c0_i32_0 = arith.constant 0 : i32
    %c0_i32_1 = arith.constant 0 : i32
    return %arg0, %c0_i32, %c0_i32_0 : i32, i32, i32
  }
}

module attributes {stable_mosaic.version = 11 : i64} {
  func.func @kernel(%arg0: i32, %arg1: memref<2x8x32xbf16, #tpu.memory_space<vmem>>, %arg2: memref<2x16x64xbf16, #tpu.memory_space<vmem>>, %arg3: memref<16x8xbf16, #tpu.memory_space<vmem>>, %arg4: memref<3x96x64xbf16, #tpu.memory_space<vmem>>, %arg5: memref<1x64xf32, #tpu.memory_space<vmem>>, %arg6: memref<3x64x64xbf16, #tpu.memory_space<vmem>>, %arg7: memref<1x64xf32, #tpu.memory_space<vmem>>, %arg8: memref<2x16x64xf32, #tpu.memory_space<vmem>>, %arg9: memref<35x96xbf16, #tpu.memory_space<vmem>>, %arg10: memref<35x64xbf16, #tpu.memory_space<vmem>>) attributes {dimension_semantics = [#tpu.dimension_semantics<parallel>], iteration_bounds = array<i64: 1>, scalar_prefetch = 0 : i64, scratch_operands = 2 : i64, tpu.core_type = #tpu.core_type<tc>, window_params = [{transform_indices = @transform_0, window_bounds = array<i64: 2, 8, 32>}, {transform_indices = @transform_1, window_bounds = array<i64: 2, 16, 64>}, {pipeline_mode = #tpu.pipeline_mode<synchronous>, transform_indices = @transform_2, window_bounds = array<i64: 16, 8>}, {pipeline_mode = #tpu.pipeline_mode<synchronous>, transform_indices = @transform_3, window_bounds = array<i64: 3, 96, 64>}, {pipeline_mode = #tpu.pipeline_mode<synchronous>, transform_indices = @transform_4, window_bounds = array<i64: 1, 64>}, {pipeline_mode = #tpu.pipeline_mode<synchronous>, transform_indices = @transform_5, window_bounds = array<i64: 3, 64, 64>}, {pipeline_mode = #tpu.pipeline_mode<synchronous>, transform_indices = @transform_6, window_bounds = array<i64: 1, 64>}, {transform_indices = @transform_7, window_bounds = array<i64: 2, 16, 64>}]} {
    %cst = arith.constant 0.000000e+00 : bf16
    %0 = vector.broadcast %cst : bf16 to vector<1x96xbf16>
    %c0 = arith.constant 0 : index
    %c0_0 = arith.constant 0 : index
    %1 = vector.load %arg9[%c0, %c0_0] : memref<35x96xbf16, #tpu.memory_space<vmem>>, vector<1x96xbf16>
    tpu.vector_store %arg9[%c0, %c0_0], %0 {strides = array<i32>} : memref<35x96xbf16, #tpu.memory_space<vmem>>, vector<1x96xbf16>,
    %cst_1 = arith.constant 0.000000e+00 : bf16
    %2 = vector.broadcast %cst_1 : bf16 to vector<1x96xbf16>
    %c17 = arith.constant 17 : index
    %c0_2 = arith.constant 0 : index
    %3 = vector.load %arg9[%c17, %c0_2] : memref<35x96xbf16, #tpu.memory_space<vmem>>, vector<1x96xbf16>
    tpu.vector_store %arg9[%c17, %c0_2], %2 {strides = array<i32>} : memref<35x96xbf16, #tpu.memory_space<vmem>>, vector<1x96xbf16>,
    %cst_3 = arith.constant 0.000000e+00 : bf16
    %4 = vector.broadcast %cst_3 : bf16 to vector<1x96xbf16>
    %c34 = arith.constant 34 : index
    %c0_4 = arith.constant 0 : index
    %5 = vector.load %arg9[%c34, %c0_4] : memref<35x96xbf16, #tpu.memory_space<vmem>>, vector<1x96xbf16>
    tpu.vector_store %arg9[%c34, %c0_4], %4 {strides = array<i32>} : memref<35x96xbf16, #tpu.memory_space<vmem>>, vector<1x96xbf16>,
    %c0_5 = arith.constant 0 : index
    %c0_6 = arith.constant 0 : index
    %c0_7 = arith.constant 0 : index
    %6 = vector.load %arg2[%c0_5, %c0_6, %c0_7] : memref<2x16x64xbf16, #tpu.memory_space<vmem>>, vector<1x16x64xbf16>
    %7 = vector.shape_cast %6 : vector<1x16x64xbf16> to vector<16x64xbf16>
    %c1 = arith.constant 1 : index
    %c0_8 = arith.constant 0 : index
    %8 = vector.load %arg9[%c1, %c0_8] : memref<35x96xbf16, #tpu.memory_space<vmem>>, vector<16x64xbf16>
    tpu.vector_store %arg9[%c1, %c0_8], %7 {strides = array<i32>} : memref<35x96xbf16, #tpu.memory_space<vmem>>, vector<16x64xbf16>,
    %c0_9 = arith.constant 0 : index
    %c0_10 = arith.constant 0 : index
    %9 = vector.load %arg3[%c0_9, %c0_10] : memref<16x8xbf16, #tpu.memory_space<vmem>>, vector<16x8xbf16>
    %c0_11 = arith.constant 0 : index
    %c0_12 = arith.constant 0 : index
    %c0_13 = arith.constant 0 : index
    %10 = vector.load %arg1[%c0_11, %c0_12, %c0_13] : memref<2x8x32xbf16, #tpu.memory_space<vmem>>, vector<1x8x32xbf16>
    %11 = vector.shape_cast %10 : vector<1x8x32xbf16> to vector<8x32xbf16>
    %cst_14 = arith.constant dense<0.000000e+00> : vector<16x32xf32>
    %12 = tpu.matmul %9, %11, %cst_14 {dimension_numbers = #tpu.dot_dimension_numbers<[1], [0], [0], [1], [0, 0, 1, 1], [], []>} : vector<16x8xbf16>, vector<8x32xbf16>, vector<16x32xf32> -> vector<16x32xf32>
    %13 = arith.truncf %12 : vector<16x32xf32> to vector<16x32xbf16>
    %c1_15 = arith.constant 1 : index
    %c64 = arith.constant 64 : index
    %14 = vector.load %arg9[%c1_15, %c64] : memref<35x96xbf16, #tpu.memory_space<vmem>>, vector<16x32xbf16>
    tpu.vector_store %arg9[%c1_15, %c64], %13 {strides = array<i32>} : memref<35x96xbf16, #tpu.memory_space<vmem>>, vector<16x32xbf16>,
    %c1_16 = arith.constant 1 : index
    %c0_17 = arith.constant 0 : index
    %c0_18 = arith.constant 0 : index
    %15 = vector.load %arg2[%c1_16, %c0_17, %c0_18] : memref<2x16x64xbf16, #tpu.memory_space<vmem>>, vector<1x16x64xbf16>
    %16 = vector.shape_cast %15 : vector<1x16x64xbf16> to vector<16x64xbf16>
    %c18 = arith.constant 18 : index
    %c0_19 = arith.constant 0 : index
    %17 = vector.load %arg9[%c18, %c0_19] : memref<35x96xbf16, #tpu.memory_space<vmem>>, vector<16x64xbf16>
    tpu.vector_store %arg9[%c18, %c0_19], %16 {strides = array<i32>} : memref<35x96xbf16, #tpu.memory_space<vmem>>, vector<16x64xbf16>,
    %c0_20 = arith.constant 0 : index
    %c0_21 = arith.constant 0 : index
    %18 = vector.load %arg3[%c0_20, %c0_21] : memref<16x8xbf16, #tpu.memory_space<vmem>>, vector<16x8xbf16>
    %c1_22 = arith.constant 1 : index
    %c0_23 = arith.constant 0 : index
    %c0_24 = arith.constant 0 : index
    %19 = vector.load %arg1[%c1_22, %c0_23, %c0_24] : memref<2x8x32xbf16, #tpu.memory_space<vmem>>, vector<1x8x32xbf16>
    %20 = vector.shape_cast %19 : vector<1x8x32xbf16> to vector<8x32xbf16>
    %cst_25 = arith.constant dense<0.000000e+00> : vector<16x32xf32>
    %21 = tpu.matmul %18, %20, %cst_25 {dimension_numbers = #tpu.dot_dimension_numbers<[1], [0], [0], [1], [0, 0, 1, 1], [], []>} : vector<16x8xbf16>, vector<8x32xbf16>, vector<16x32xf32> -> vector<16x32xf32>
    %22 = arith.truncf %21 : vector<16x32xf32> to vector<16x32xbf16>
    %c18_26 = arith.constant 18 : index
    %c64_27 = arith.constant 64 : index
    %23 = vector.load %arg9[%c18_26, %c64_27] : memref<35x96xbf16, #tpu.memory_space<vmem>>, vector<16x32xbf16>
    tpu.vector_store %arg9[%c18_26, %c64_27], %22 {strides = array<i32>} : memref<35x96xbf16, #tpu.memory_space<vmem>>, vector<16x32xbf16>,
    %c0_28 = arith.constant 0 : index
    %c0_29 = arith.constant 0 : index
    %24 = vector.load %arg9[%c0_28, %c0_29] : memref<35x96xbf16, #tpu.memory_space<vmem>>, vector<33x96xbf16>
    %c0_30 = arith.constant 0 : index
    %c0_31 = arith.constant 0 : index
    %c0_32 = arith.constant 0 : index
    %25 = vector.load %arg4[%c0_30, %c0_31, %c0_32] : memref<3x96x64xbf16, #tpu.memory_space<vmem>>, vector<1x96x64xbf16>
    %26 = vector.shape_cast %25 : vector<1x96x64xbf16> to vector<96x64xbf16>
    %cst_33 = arith.constant dense<0.000000e+00> : vector<33x64xf32>
    %27 = tpu.matmul %24, %26, %cst_33 {dimension_numbers = #tpu.dot_dimension_numbers<[1], [0], [0], [1], [0, 0, 1, 1], [], []>} : vector<33x96xbf16>, vector<96x64xbf16>, vector<33x64xf32> -> vector<33x64xf32>
    %c1_34 = arith.constant 1 : index
    %c0_35 = arith.constant 0 : index
    %28 = vector.load %arg9[%c1_34, %c0_35] : memref<35x96xbf16, #tpu.memory_space<vmem>>, vector<33x96xbf16>
    %c1_36 = arith.constant 1 : index
    %c0_37 = arith.constant 0 : index
    %c0_38 = arith.constant 0 : index
    %29 = vector.load %arg4[%c1_36, %c0_37, %c0_38] : memref<3x96x64xbf16, #tpu.memory_space<vmem>>, vector<1x96x64xbf16>
    %30 = vector.shape_cast %29 : vector<1x96x64xbf16> to vector<96x64xbf16>
    %cst_39 = arith.constant dense<0.000000e+00> : vector<33x64xf32>
    %31 = tpu.matmul %28, %30, %cst_39 {dimension_numbers = #tpu.dot_dimension_numbers<[1], [0], [0], [1], [0, 0, 1, 1], [], []>} : vector<33x96xbf16>, vector<96x64xbf16>, vector<33x64xf32> -> vector<33x64xf32>
    %32 = arith.addf %27, %31 : vector<33x64xf32>
    %c2 = arith.constant 2 : index
    %c0_40 = arith.constant 0 : index
    %33 = vector.load %arg9[%c2, %c0_40] : memref<35x96xbf16, #tpu.memory_space<vmem>>, vector<33x96xbf16>
    %c2_41 = arith.constant 2 : index
    %c0_42 = arith.constant 0 : index
    %c0_43 = arith.constant 0 : index
    %34 = vector.load %arg4[%c2_41, %c0_42, %c0_43] : memref<3x96x64xbf16, #tpu.memory_space<vmem>>, vector<1x96x64xbf16>
    %35 = vector.shape_cast %34 : vector<1x96x64xbf16> to vector<96x64xbf16>
    %cst_44 = arith.constant dense<0.000000e+00> : vector<33x64xf32>
    %36 = tpu.matmul %33, %35, %cst_44 {dimension_numbers = #tpu.dot_dimension_numbers<[1], [0], [0], [1], [0, 0, 1, 1], [], []>} : vector<33x96xbf16>, vector<96x64xbf16>, vector<33x64xf32> -> vector<33x64xf32>
    %37 = arith.addf %32, %36 : vector<33x64xf32>
    %c0_45 = arith.constant 0 : index
    %c0_46 = arith.constant 0 : index
    %38 = vector.load %arg5[%c0_45, %c0_46] : memref<1x64xf32, #tpu.memory_space<vmem>>, vector<1x64xf32>
    %39 = vector.broadcast %38 : vector<1x64xf32> to vector<33x64xf32>
    %40 = arith.addf %37, %39 : vector<33x64xf32>
    %cst_47 = arith.constant 0.000000e+00 : f32
    %41 = vector.broadcast %cst_47 : f32 to vector<33x64xf32>
    %42 = arith.maximumf %40, %41 : vector<33x64xf32>
    %43 = arith.truncf %42 : vector<33x64xf32> to vector<33x64xbf16>
    %c1_48 = arith.constant 1 : index
    %c0_49 = arith.constant 0 : index
    %44 = vector.load %arg10[%c1_48, %c0_49] : memref<35x64xbf16, #tpu.memory_space<vmem>>, vector<33x64xbf16>
    tpu.vector_store %arg10[%c1_48, %c0_49], %43 {strides = array<i32>} : memref<35x64xbf16, #tpu.memory_space<vmem>>, vector<33x64xbf16>,
    %cst_50 = arith.constant 0.000000e+00 : bf16
    %45 = vector.broadcast %cst_50 : bf16 to vector<1x64xbf16>
    %c0_51 = arith.constant 0 : index
    %c0_52 = arith.constant 0 : index
    %46 = vector.load %arg10[%c0_51, %c0_52] : memref<35x64xbf16, #tpu.memory_space<vmem>>, vector<1x64xbf16>
    tpu.vector_store %arg10[%c0_51, %c0_52], %45 {strides = array<i32>} : memref<35x64xbf16, #tpu.memory_space<vmem>>, vector<1x64xbf16>,
    %cst_53 = arith.constant 0.000000e+00 : bf16
    %47 = vector.broadcast %cst_53 : bf16 to vector<1x64xbf16>
    %c17_54 = arith.constant 17 : index
    %c0_55 = arith.constant 0 : index
    %48 = vector.load %arg10[%c17_54, %c0_55] : memref<35x64xbf16, #tpu.memory_space<vmem>>, vector<1x64xbf16>
    tpu.vector_store %arg10[%c17_54, %c0_55], %47 {strides = array<i32>} : memref<35x64xbf16, #tpu.memory_space<vmem>>, vector<1x64xbf16>,
    %cst_56 = arith.constant 0.000000e+00 : bf16
    %49 = vector.broadcast %cst_56 : bf16 to vector<1x64xbf16>
    %c34_57 = arith.constant 34 : index
    %c0_58 = arith.constant 0 : index
    %50 = vector.load %arg10[%c34_57, %c0_58] : memref<35x64xbf16, #tpu.memory_space<vmem>>, vector<1x64xbf16>
    tpu.vector_store %arg10[%c34_57, %c0_58], %49 {strides = array<i32>} : memref<35x64xbf16, #tpu.memory_space<vmem>>, vector<1x64xbf16>,
    %c0_59 = arith.constant 0 : index
    %c0_60 = arith.constant 0 : index
    %51 = vector.load %arg10[%c0_59, %c0_60] : memref<35x64xbf16, #tpu.memory_space<vmem>>, vector<33x64xbf16>
    %c0_61 = arith.constant 0 : index
    %c0_62 = arith.constant 0 : index
    %c0_63 = arith.constant 0 : index
    %52 = vector.load %arg6[%c0_61, %c0_62, %c0_63] : memref<3x64x64xbf16, #tpu.memory_space<vmem>>, vector<1x64x64xbf16>
    %53 = vector.shape_cast %52 : vector<1x64x64xbf16> to vector<64x64xbf16>
    %cst_64 = arith.constant dense<0.000000e+00> : vector<33x64xf32>
    %54 = tpu.matmul %51, %53, %cst_64 {dimension_numbers = #tpu.dot_dimension_numbers<[1], [0], [0], [1], [0, 0, 1, 1], [], []>} : vector<33x64xbf16>, vector<64x64xbf16>, vector<33x64xf32> -> vector<33x64xf32>
    %c1_65 = arith.constant 1 : index
    %c0_66 = arith.constant 0 : index
    %55 = vector.load %arg10[%c1_65, %c0_66] : memref<35x64xbf16, #tpu.memory_space<vmem>>, vector<33x64xbf16>
    %c1_67 = arith.constant 1 : index
    %c0_68 = arith.constant 0 : index
    %c0_69 = arith.constant 0 : index
    %56 = vector.load %arg6[%c1_67, %c0_68, %c0_69] : memref<3x64x64xbf16, #tpu.memory_space<vmem>>, vector<1x64x64xbf16>
    %57 = vector.shape_cast %56 : vector<1x64x64xbf16> to vector<64x64xbf16>
    %cst_70 = arith.constant dense<0.000000e+00> : vector<33x64xf32>
    %58 = tpu.matmul %55, %57, %cst_70 {dimension_numbers = #tpu.dot_dimension_numbers<[1], [0], [0], [1], [0, 0, 1, 1], [], []>} : vector<33x64xbf16>, vector<64x64xbf16>, vector<33x64xf32> -> vector<33x64xf32>
    %59 = arith.addf %54, %58 : vector<33x64xf32>
    %c2_71 = arith.constant 2 : index
    %c0_72 = arith.constant 0 : index
    %60 = vector.load %arg10[%c2_71, %c0_72] : memref<35x64xbf16, #tpu.memory_space<vmem>>, vector<33x64xbf16>
    %c2_73 = arith.constant 2 : index
    %c0_74 = arith.constant 0 : index
    %c0_75 = arith.constant 0 : index
    %61 = vector.load %arg6[%c2_73, %c0_74, %c0_75] : memref<3x64x64xbf16, #tpu.memory_space<vmem>>, vector<1x64x64xbf16>
    %62 = vector.shape_cast %61 : vector<1x64x64xbf16> to vector<64x64xbf16>
    %cst_76 = arith.constant dense<0.000000e+00> : vector<33x64xf32>
    %63 = tpu.matmul %60, %62, %cst_76 {dimension_numbers = #tpu.dot_dimension_numbers<[1], [0], [0], [1], [0, 0, 1, 1], [], []>} : vector<33x64xbf16>, vector<64x64xbf16>, vector<33x64xf32> -> vector<33x64xf32>
    %64 = arith.addf %59, %63 : vector<33x64xf32>
    %c0_77 = arith.constant 0 : index
    %c0_78 = arith.constant 0 : index
    %65 = vector.load %arg7[%c0_77, %c0_78] : memref<1x64xf32, #tpu.memory_space<vmem>>, vector<1x64xf32>
    %66 = vector.broadcast %65 : vector<1x64xf32> to vector<33x64xf32>
    %67 = arith.addf %64, %66 : vector<33x64xf32>
    %cst_79 = arith.constant 0.000000e+00 : f32
    %68 = vector.broadcast %cst_79 : f32 to vector<33x64xf32>
    %69 = arith.maximumf %67, %68 : vector<33x64xf32>
    %70 = vector.extract_strided_slice %69 {offsets = [0, 0], sizes = [16, 64], strides = [1, 1]} : vector<33x64xf32> to vector<16x64xf32>
    %c0_80 = arith.constant 0 : index
    %c0_81 = arith.constant 0 : index
    %c0_82 = arith.constant 0 : index
    %71 = vector.load %arg8[%c0_80, %c0_81, %c0_82] : memref<2x16x64xf32, #tpu.memory_space<vmem>>, vector<1x16x64xf32>
    %72 = vector.shape_cast %71 : vector<1x16x64xf32> to vector<16x64xf32>
    %73 = vector.shape_cast %70 : vector<16x64xf32> to vector<1x16x64xf32>
    tpu.vector_store %arg8[%c0_80, %c0_81, %c0_82], %73 {strides = array<i32>} : memref<2x16x64xf32, #tpu.memory_space<vmem>>, vector<1x16x64xf32>,
    %74 = vector.extract_strided_slice %69 {offsets = [17, 0], sizes = [16, 64], strides = [1, 1]} : vector<33x64xf32> to vector<16x64xf32>
    %c1_83 = arith.constant 1 : index
    %c0_84 = arith.constant 0 : index
    %c0_85 = arith.constant 0 : index
    %75 = vector.load %arg8[%c1_83, %c0_84, %c0_85] : memref<2x16x64xf32, #tpu.memory_space<vmem>>, vector<1x16x64xf32>
    %76 = vector.shape_cast %75 : vector<1x16x64xf32> to vector<16x64xf32>
    %77 = vector.shape_cast %74 : vector<16x64xf32> to vector<1x16x64xf32>
    tpu.vector_store %arg8[%c1_83, %c0_84, %c0_85], %77 {strides = array<i32>} : memref<2x16x64xf32, #tpu.memory_space<vmem>>, vector<1x16x64xf32>,
    return
  }
  func.func @transform_0(%arg0: i32) -> (i32, i32, i32) {
    %c0_i32 = arith.constant 0 : i32
    %c0_i32_0 = arith.constant 0 : i32
    %c0_i32_1 = arith.constant 0 : i32
    return %arg0, %c0_i32, %c0_i32_0 : i32, i32, i32
  }
  func.func @transform_1(%arg0: i32) -> (i32, i32, i32) {
    %c0_i32 = arith.constant 0 : i32
    %c0_i32_0 = arith.constant 0 : i32
    %c0_i32_1 = arith.constant 0 : i32
    return %arg0, %c0_i32, %c0_i32_0 : i32, i32, i32
  }
  func.func @transform_2(%arg0: i32) -> (i32, i32) {
    %c0_i32 = arith.constant 0 : i32
    %c0_i32_0 = arith.constant 0 : i32
    %c0_i32_1 = arith.constant 0 : i32
    return %c0_i32, %c0_i32_0 : i32, i32
  }
  func.func @transform_3(%arg0: i32) -> (i32, i32, i32) {
    %c0_i32 = arith.constant 0 : i32
    %c0_i32_0 = arith.constant 0 : i32
    %c0_i32_1 = arith.constant 0 : i32
    %c0_i32_2 = arith.constant 0 : i32
    return %c0_i32, %c0_i32_0, %c0_i32_1 : i32, i32, i32
  }
  func.func @transform_4(%arg0: i32) -> (i32, i32) {
    %c0_i32 = arith.constant 0 : i32
    %c0_i32_0 = arith.constant 0 : i32
    %c0_i32_1 = arith.constant 0 : i32
    return %c0_i32, %c0_i32_0 : i32, i32
  }
  func.func @transform_5(%arg0: i32) -> (i32, i32, i32) {
    %c0_i32 = arith.constant 0 : i32
    %c0_i32_0 = arith.constant 0 : i32
    %c0_i32_1 = arith.constant 0 : i32
    %c0_i32_2 = arith.constant 0 : i32
    return %c0_i32, %c0_i32_0, %c0_i32_1 : i32, i32, i32
  }
  func.func @transform_6(%arg0: i32) -> (i32, i32) {
    %c0_i32 = arith.constant 0 : i32
    %c0_i32_0 = arith.constant 0 : i32
    %c0_i32_1 = arith.constant 0 : i32
    return %c0_i32, %c0_i32_0 : i32, i32
  }
  func.func @transform_7(%arg0: i32) -> (i32, i32, i32) {
    %c0_i32 = arith.constant 0 : i32
    %c0_i32_0 = arith.constant 0 : i32
    %c0_i32_1 = arith.constant 0 : i32
    return %arg0, %c0_i32, %c0_i32_0 : i32, i32, i32
  }
}

</mosaic_0001>

<llo_original>
// kernel: tpu_custom_call.1
$region0: #{tpu_custom_call.1}
  #allocation0 [shape = 'u32[]', space=smem, size = 0x4, offset = 0x4, fixed_abs, tag = 'smem constant byte address 0x4 - core index']
  #allocation1 [shape = 'u32[144,128]{1,0:T(1,128)}', space=vmem, size = 0x12000, scoped, tag = 'internal scratch']
  #allocation2 [shape = 'bf16[35,96]{1,0:T(8,128)(2,1)}', space=vmem, size = 0x2800, scoped, tag = 'scratch operand']
  #allocation3 [shape = 'bf16[35,64]{1,0:T(8,128)(2,1)}', space=vmem, size = 0x2800, scoped, tag = 'scratch operand']
  %s0 = inlined_call_operand.vmem [shape: bf16[2,8,32], index: 0, kind: input, shape index: {}]
  %s1 = inlined_call_operand.vmem [shape: bf16[2,16,64], index: 1, kind: input, shape index: {}]
  %s2 = inlined_call_operand.vmem [shape: bf16[16,8], index: 2, kind: input, shape index: {}]
  %s3 = inlined_call_operand.vmem [shape: bf16[3,96,64], index: 3, kind: input, shape index: {}]
  %s4 = inlined_call_operand.vmem [shape: f32[1,64], index: 4, kind: input, shape index: {}]
  %s5 = inlined_call_operand.vmem [shape: bf16[3,64,64], index: 5, kind: input, shape index: {}]
  %s6 = inlined_call_operand.vmem [shape: f32[1,64], index: 6, kind: input, shape index: {}]
  %s7 = inlined_call_operand.hbm [shape: f32[2,16,64], index: 7, kind: output, shape index: {}]
  %s8 = sld [smem:[#allocation0]]
  $region38: #{tpu_custom_call.1} parent=0
    _
  %s10 = ssub.s32 1, %s8
  %s11 = scalar_select 0, %s10, %s8
  $region1: #{tpu_custom_call.1} parent=0
    #allocation4 [shape = 'u8[16384]{0}', space=vmem, size = 0x4000, scoped, tag = 'output window, operand 0, single buffered']
    #allocation5 [shape = 's32[1]{0}', space=sflag, size = 0x4, scoped, tag = 'scoped memory for tpu_custom_call.1']
    %12 = vsyncpa [#allocation5], 0
    // Predicated region
    $region2: #{tpu_custom_call.1} parent=1 // pred_check
      _
    $region3: #{tpu_custom_call.1} parent=1 // pred_check_branch
      %14 = sbr.rel (0) target = $region5
    $region4: #{tpu_custom_call.1} parent=1 // pred_region
      _
    $region5: #{tpu_custom_call.1} parent=1 // pred_fallthru
      _
    // Predicated region
    $region6: #{tpu_custom_call.1} parent=1 // pred_check
      _
    $region7: #{tpu_custom_call.1} parent=1 // pred_check_branch
      %16 = sbr.rel (0) target = $region9
    $region8: #{tpu_custom_call.1} parent=1 // pred_region
      _
    $region9: #{tpu_custom_call.1} parent=1 // pred_fallthru
      _
    // Predicated region
    $region10: #{tpu_custom_call.1} parent=1 // pred_check
      _
    $region11: #{tpu_custom_call.1} parent=1 // pred_check_branch
      %18 = sbr.rel (0) target = $region13
    $region12: #{tpu_custom_call.1} parent=1 // pred_region
      _
    $region13: #{tpu_custom_call.1} parent=1 // pred_fallthru
      _
    // Predicated region
    $region14: #{tpu_custom_call.1} parent=1 // pred_check
      _
    $region15: #{tpu_custom_call.1} parent=1 // pred_check_branch
      %20 = sbr.rel (0) target = $region17
    $region16: #{tpu_custom_call.1} parent=1 // pred_region
      _
    $region17: #{tpu_custom_call.1} parent=1 // pred_fallthru
      _
    // Predicated region
    $region18: #{tpu_custom_call.1} parent=1 // pred_check
      _
    $region19: #{tpu_custom_call.1} parent=1 // pred_check_branch
      %22 = sbr.rel (0) target = $region21
    $region20: #{tpu_custom_call.1} parent=1 // pred_region
      _
    $region21: #{tpu_custom_call.1} parent=1 // pred_fallthru
      _
    // Predicated region
    $region22: #{tpu_custom_call.1} parent=1 // pred_check
      _
    $region23: #{tpu_custom_call.1} parent=1 // pred_check_branch
      %24 = sbr.rel (0) target = $region25
    $region24: #{tpu_custom_call.1} parent=1 // pred_region
      _
    $region25: #{tpu_custom_call.1} parent=1 // pred_fallthru
      _
    // Predicated region
    $region26: #{tpu_custom_call.1} parent=1 // pred_check
      _
    $region27: #{tpu_custom_call.1} parent=1 // pred_check_branch
      %26 = sbr.rel (0) target = $region29
    $region28: #{tpu_custom_call.1} parent=1 // pred_region
      _
    $region29: #{tpu_custom_call.1} parent=1 // pred_fallthru
      _
    %vm28 = vcmask 778240
    %vm29 = vsmask.f32 256
    %vm30 = vmand %vm28, %vm29
    %v31 = vld [vmem:[#allocation2] sm:$0x1]
    %v32 = vsel %vm30, 0, %v31
    %33 = vst [vmem:[#allocation2] sm:$0x1] %v32
    %vm34 = vsmask.f32 7938
    %vm35 = vmand %vm28, %vm34
    %v36 = vld [vmem:[#allocation2 + $0x8] sm:$0x1]
    %v37 = vsel %vm35, 0, %v36
    %38 = vst [vmem:[#allocation2 + $0x8] sm:$0x1] %v37
    %vm39 = vcmask 779265
    %vm40 = vsmask.f32 1280
    %vm41 = vmand %vm39, %vm40
    %v42 = vld [vmem:[#allocation2 + $0x10] sm:$0x2]
    %v43 = vsel %vm41, 0, %v42
    %44 = vst [vmem:[#allocation2 + $0x10] sm:$0x2] %v43
    %v45 = vld [vmem:[%s1] sm:$0xf]
    %v46 = vld [vmem:[%s1 + $0x4] sm:$0xf]
    %vm47 = vsmask.f32 4368
    %vm48 = vmor %vm29, %vm47
    %v50 = vshrl.u32 %v45, 16
    %v52 = vrot.slane %v50, 7
    %v53 = vshll.u32 %v45, 16
    %v55 = vor.u32 %v52, %v53
    %v56 = vrot.slane %v52, 4
    %v58 = vshrl.u32 %v46, 16
    %v60 = vrot.slane %v58, 7
    %v61 = vshll.u32 %v46, 16
    %v63 = vor.u32 %v60, %v61
    %v64 = vsel %vm48, %v56, %v63
    %v65 = vrot.slane %v60, 4
    %vm69 = vcmask 519168
    %vm70 = vmand %vm69, %vm34
    %v71 = vld [vmem:[#allocation2] sm:$0xf]
    %v72 = vsel %vm70, %v55, %v71
    %73 = vst [vmem:[#allocation2] sm:$0xf] %v72
    %vm74 = vcmask 519168
    %75 = vst.msk [vmem:[#allocation2 + $0x4] sm:$0xf] %vm74, %v64
    %vm76 = vcmask 516096
    %vm77 = vmand %vm76, %vm29
    %v78 = vld [vmem:[#allocation2 + $0x8] sm:$0x1]
    %v79 = vsel %vm77, %v65, %v78
    %80 = vst [vmem:[#allocation2 + $0x8] sm:$0x1] %v79
    %v81 = vld [vmem:[%s2] sm:$0xf]
    %v82 = vld [vmem:[%s2 + $0x4] sm:$0xf]
    %v83 = vld [vmem:[%s0] sm:$0xf]
    %v86 = vunpack.c.l.b16 %v81
    %v87 = vunpack.c.l.b16 %v82
    %v88 = vpack.c.b16 %v87, %v86
    %vm89 = vcmask 64512
    %v91 = vsel %vm89, %v88, 0
    %vm93 = vcmask 1043456
    %v95 = vsel %vm93, %v83, 0
    %97 = vmatprep.subr.bf16.mxu0 0
    %98 = vmatpush1.bf16.msra.mxu0 0
    %99 = vmatprep.subr.bf16.mxu0 0
    %100 = vmatpush1.bf16.msra.mxu0 0
    %101 = vmatprep.subr.bf16.mxu0 0
    %102 = vmatpush1.bf16.msra.mxu0 0
    %103 = vmatprep.subr.bf16.mxu0 0
    %104 = vmatpush1.bf16.msra.mxu0 0
    %105 = vmatprep.subr.bf16.mxu0 0
    %106 = vmatpush1.bf16.msra.mxu0 0
    %107 = vmatprep.subr.bf16.mxu0 0
    %108 = vmatpush1.bf16.msra.mxu0 0
    %109 = vmatprep.subr.bf16.mxu0 0
    %110 = vmatpush1.bf16.msra.mxu0 0
    %111 = vmatprep.subr.bf16.mxu0 0
    %112 = vmatpush1.bf16.msra.mxu0 %v95
    %113 = vmatprep.subr.bf16.mxu0 0
    %114 = vmatpush2.bf16.msra.mxu0 0
    %115 = vmatprep.subr.bf16.mxu0 0
    %116 = vmatpush2.bf16.msra.mxu0 0
    %117 = vmatprep.subr.bf16.mxu0 0
    %118 = vmatpush2.bf16.msra.mxu0 0
    %119 = vmatprep.subr.bf16.mxu0 0
    %120 = vmatpush2.bf16.msra.mxu0 0
    %121 = vmatprep.subr.bf16.mxu0 0
    %122 = vmatpush2.bf16.msra.mxu0 0
    %123 = vmatprep.subr.bf16.mxu0 0
    %124 = vmatpush2.bf16.msra.mxu0 0
    %125 = vmatprep.subr.bf16.mxu0 0
    %126 = vmatpush2.bf16.msra.mxu0 0
    %127 = vmatprep.subr.bf16.mxu0 0
    %128 = vmatpush2.bf16.msra.mxu0 0
    %129 = vmatprep.mubr.bf16.mxu0 0
    %130 = vmatmul.mubr.bf16.gmra.mxu0 %v91
    %v131 = vpop.f32.mrf.mxu0
    %v132 = vadd.f32 0.0, %v131
    %v133 = vpop.f32.mrf.mxu0
    %v134 = vpop.f32.mrf.mxu0
    %v135 = vadd.f32 0.0, %v134
    %v136 = vpop.f32.mrf.mxu0
    %137 = vdwg.mxu0
    %v138 = vpack.c.bf16 %v135, %v132
    %v140 = vunpack.c.l.b16 %v138
    %v141 = vunpack.c.h.b16 %v138
    %v142 = vpack.c.b16 %v140, %v140
    %v143 = vpack.c.b16 %v141, %v141
    %v145 = vshrl.u32 %v142, 16
    %v147 = vrot.slane %v145, 7
    %v148 = vshll.u32 %v142, 16
    %v150 = vor.u32 %v147, %v148
    %v151 = vrot.slane %v147, 4
    %v153 = vshrl.u32 %v143, 16
    %v155 = vrot.slane %v153, 7
    %v156 = vshll.u32 %v143, 16
    %v158 = vor.u32 %v155, %v156
    %v159 = vsel %vm48, %v151, %v158
    %v160 = vrot.slane %v155, 4
    %161 = vrot.lane.b32.xlu0 %v150, 64
    %v162 = vpop.permute.xlu0 %161
    %163 = vrot.lane.b32.xlu0 %v159, 64
    %v164 = vpop.permute.xlu0 %163
    %165 = vrot.lane.b32.xlu0 %v160, 64
    %v166 = vpop.permute.xlu0 %165
    %vm170 = vcmask 781824
    %vm171 = vmand %vm170, %vm34
    %v172 = vld [vmem:[#allocation2] sm:$0xf]
    %v173 = vsel %vm171, %v162, %v172
    %174 = vst [vmem:[#allocation2] sm:$0xf] %v173
    %vm175 = vcmask 781824
    %176 = vst.msk [vmem:[#allocation2 + $0x4] sm:$0xf] %vm175, %v164
    %vm177 = vcmask 778752
    %vm178 = vmand %vm177, %vm29
    %v179 = vld [vmem:[#allocation2 + $0x8] sm:$0x1]
    %v180 = vsel %vm178, %v166, %v179
    %181 = vst [vmem:[#allocation2 + $0x8] sm:$0x1] %v180
    %s182 = scalar_lea.vmem %s1, 8
    %v183 = vld [vmem:[%s182] sm:$0xf]
    %v184 = vld [vmem:[%s182 + $0x4] sm:$0xf]
    %vm187 = vcmask 1040384
    %vm188 = vcmask 1044484
    %vm189 = vmor %vm187, %vm188
    %v190 = vrot.slane %v183, 7
    %v191 = vrot.slane %v190, 4
    %v192 = vrot.slane %v184, 7
    %v193 = vsel %vm189, %v191, %v192
    %v194 = vrot.slane %v192, 4
    %vm198 = vcmask 519169
    %199 = vst.msk [vmem:[#allocation2 + $0x8] sm:$0xe] %vm198, %v190
    %200 = vst.msk [vmem:[#allocation2 + $0xc] sm:$0xf] %vm74, %v193
    %vm201 = vcmask 516096
    %202 = vst.msk [vmem:[#allocation2 + $0x10] sm:$0x1] %vm201, %v194
    %v203 = vld [vmem:[%s2] sm:$0xf]
    %v204 = vld [vmem:[%s2 + $0x4] sm:$0xf]
    %s205 = scalar_lea.vmem %s0, 4
    %v206 = vld [vmem:[%s205] sm:$0xf]
    %v209 = vunpack.c.l.b16 %v203
    %v210 = vunpack.c.l.b16 %v204
    %v211 = vpack.c.b16 %v210, %v209
    %v213 = vsel %vm89, %v211, 0
    %v216 = vsel %vm93, %v206, 0
    %218 = vmatprep.subr.bf16.mxu0 0
    %219 = vmatpush1.bf16.msra.mxu0 0
    %220 = vmatprep.subr.bf16.mxu0 0
    %221 = vmatpush1.bf16.msra.mxu0 0
    %222 = vmatprep.subr.bf16.mxu0 0
    %223 = vmatpush1.bf16.msra.mxu0 0
    %224 = vmatprep.subr.bf16.mxu0 0
    %225 = vmatpush1.bf16.msra.mxu0 0
    %226 = vmatprep.subr.bf16.mxu0 0
    %227 = vmatpush1.bf16.msra.mxu0 0
    %228 = vmatprep.subr.bf16.mxu0 0
    %229 = vmatpush1.bf16.msra.mxu0 0
    %230 = vmatprep.subr.bf16.mxu0 0
    %231 = vmatpush1.bf16.msra.mxu0 0
    %232 = vmatprep.subr.bf16.mxu0 0
    %233 = vmatpush1.bf16.msra.mxu0 %v216
    %234 = vmatprep.subr.bf16.mxu0 0
    %235 = vmatpush2.bf16.msra.mxu0 0
    %236 = vmatprep.subr.bf16.mxu0 0
    %237 = vmatpush2.bf16.msra.mxu0 0
    %238 = vmatprep.subr.bf16.mxu0 0
    %239 = vmatpush2.bf16.msra.mxu0 0
    %240 = vmatprep.subr.bf16.mxu0 0
    %241 = vmatpush2.bf16.msra.mxu0 0
    %242 = vmatprep.subr.bf16.mxu0 0
    %243 = vmatpush2.bf16.msra.mxu0 0
    %244 = vmatprep.subr.bf16.mxu0 0
    %245 = vmatpush2.bf16.msra.mxu0 0
    %246 = vmatprep.subr.bf16.mxu0 0
    %247 = vmatpush2.bf16.msra.mxu0 0
    %248 = vmatprep.subr.bf16.mxu0 0
    %249 = vmatpush2.bf16.msra.mxu0 0
    %250 = vmatprep.mubr.bf16.mxu0 0
    %251 = vmatmul.mubr.bf16.gmra.mxu0 %v213
    %v252 = vpop.f32.mrf.mxu0
    %v253 = vadd.f32 0.0, %v252
    %v254 = vpop.f32.mrf.mxu0
    %v255 = vpop.f32.mrf.mxu0
    %v256 = vadd.f32 0.0, %v255
    %v257 = vpop.f32.mrf.mxu0
    %258 = vdwg.mxu0
    %v259 = vpack.c.bf16 %v256, %v253
    %v261 = vunpack.c.l.b16 %v259
    %v262 = vunpack.c.h.b16 %v259
    %v263 = vpack.c.b16 %v261, %v261
    %v264 = vpack.c.b16 %v262, %v262
    %v265 = vrot.slane %v263, 7
    %v266 = vrot.slane %v265, 4
    %v267 = vrot.slane %v264, 7
    %v268 = vsel %vm189, %v266, %v267
    %v269 = vrot.slane %v267, 4
    %270 = vrot.lane.b32.xlu0 %v265, 64
    %v271 = vpop.permute.xlu0 %270
    %272 = vrot.lane.b32.xlu0 %v268, 64
    %v273 = vpop.permute.xlu0 %272
    %274 = vrot.lane.b32.xlu0 %v269, 64
    %v275 = vpop.permute.xlu0 %274
    %vm279 = vcmask 781825
    %280 = vst.msk [vmem:[#allocation2 + $0x8] sm:$0xe] %vm279, %v271
    %281 = vst.msk [vmem:[#allocation2 + $0xc] sm:$0xf] %vm175, %v273
    %vm282 = vcmask 778752
    %283 = vst.msk [vmem:[#allocation2 + $0x10] sm:$0x1] %vm282, %v275
    %v284 = vld [vmem:[#allocation2] sm:$0xf]
    %v285 = vld [vmem:[#allocation2 + $0x4] sm:$0xf]
    %v286 = vld [vmem:[#allocation2 + $0x8] sm:$0xf]
    %v287 = vld [vmem:[#allocation2 + $0xc] sm:$0xf]
    %v288 = vld [vmem:[#allocation2 + $0x10] sm:$0x1]
    %v289 = vld [vmem:[%s3] sm:$0xf]
    %v290 = vld [vmem:[%s3 + $0x4] sm:$0xf]
    %v291 = vld [vmem:[%s3 + $0x8] sm:$0xf]
    %v292 = vld [vmem:[%s3 + $0xc] sm:$0xf]
    %v293 = vld [vmem:[%s3 + $0x10] sm:$0xf]
    %v294 = vld [vmem:[%s3 + $0x14] sm:$0xf]
    %v295 = vld [vmem:[%s3 + $0x18] sm:$0xf]
    %v296 = vld [vmem:[%s3 + $0x1c] sm:$0xf]
    %v297 = vld [vmem:[%s3 + $0x20] sm:$0xf]
    %v298 = vld [vmem:[%s3 + $0x24] sm:$0xf]
    %v299 = vld [vmem:[%s3 + $0x28] sm:$0xf]
    %v300 = vld [vmem:[%s3 + $0x2c] sm:$0xf]
    %s301 = scalar_lea.vmem %s3, 48
    %v302 = vld [vmem:[%s301] sm:$0xf]
    %v303 = vld [vmem:[%s301 + $0x4] sm:$0xf]
    %v304 = vld [vmem:[%s301 + $0x8] sm:$0xf]
    %v305 = vld [vmem:[%s301 + $0xc] sm:$0xf]
    %v306 = vld [vmem:[%s301 + $0x10] sm:$0xf]
    %v307 = vld [vmem:[%s301 + $0x14] sm:$0xf]
    %v308 = vld [vmem:[%s301 + $0x18] sm:$0xf]
    %v309 = vld [vmem:[%s301 + $0x1c] sm:$0xf]
    %v310 = vld [vmem:[%s301 + $0x20] sm:$0xf]
    %v311 = vld [vmem:[%s301 + $0x24] sm:$0xf]
    %v312 = vld [vmem:[%s301 + $0x28] sm:$0xf]
    %v313 = vld [vmem:[%s301 + $0x2c] sm:$0xf]
    %v319 = vunpack.c.l.b16 %v284
    %v320 = vunpack.c.l.b16 %v285
    %v321 = vunpack.c.l.b16 %v286
    %v322 = vunpack.c.l.b16 %v287
    %v323 = vunpack.c.l.b16 %v288
    %v324 = vpack.c.b16 %v320, %v319
    %v325 = vpack.c.b16 %v322, %v321
    %v326 = vpack.c.b16 %v323, %v323
    %vm327 = vsmask.f32 7424
    %v329 = vshrl.u32 %v324, 16
    %v331 = vshll.u32 %v324, 16
    %v333 = vrot.slane %v331, 1
    %v334 = vor.u32 %v329, %v333
    %v336 = vshll.u32 %v325, 16
    %v338 = vrot.slane %v336, 1
    %v339 = vsel %vm327, %v334, %v338
    %v340 = vshrl.u32 %v325, 16
    %v342 = vor.u32 %v340, %v338
    %v344 = vshll.u32 %v326, 16
    %v346 = vrot.slane %v344, 1
    %v347 = vsel %vm327, %v342, %v346
    %v348 = vshrl.u32 %v326, 16
    %v362 = vunpack.c.l.b16 %v302
    %v363 = vunpack.c.l.b16 %v303
    %v364 = vunpack.c.l.b16 %v304
    %v365 = vunpack.c.l.b16 %v305
    %v366 = vunpack.c.l.b16 %v306
    %v367 = vunpack.c.l.b16 %v307
    %v368 = vunpack.c.l.b16 %v308
    %v369 = vunpack.c.l.b16 %v309
    %v370 = vunpack.c.l.b16 %v310
    %v371 = vunpack.c.l.b16 %v311
    %v372 = vunpack.c.l.b16 %v312
    %v373 = vunpack.c.l.b16 %v313
    %v374 = vpack.c.b16 %v363, %v362
    %v375 = vpack.c.b16 %v365, %v364
    %v376 = vpack.c.b16 %v367, %v366
    %v377 = vpack.c.b16 %v369, %v368
    %v378 = vpack.c.b16 %v371, %v370
    %v379 = vpack.c.b16 %v373, %v372
    %vm386 = vcmask 785408
    %v388 = vsel %vm386, %v339, 0
    %v391 = vsel %vm386, %v347, 0
    %v394 = vsel %vm386, %v348, 0
    %396 = vmatprep.subr.bf16.mxu0 0
    %397 = vmatpush1.bf16.msra.mxu0 0
    %398 = vmatprep.subr.bf16.mxu0 0
    %399 = vmatpush1.bf16.msra.mxu0 0
    %400 = vmatprep.subr.bf16.mxu0 0
    %401 = vmatpush1.bf16.msra.mxu0 %v379
    %402 = vmatprep.subr.bf16.mxu0 0
    %403 = vmatpush1.bf16.msra.mxu0 %v378
    %404 = vmatprep.subr.bf16.mxu0 0
    %405 = vmatpush1.bf16.msra.mxu0 %v377
    %406 = vmatprep.subr.bf16.mxu0 0
    %407 = vmatpush1.bf16.msra.mxu0 %v376
    %408 = vmatprep.subr.bf16.mxu0 0
    %409 = vmatpush1.bf16.msra.mxu0 %v375
    %410 = vmatprep.subr.bf16.mxu0 0
    %411 = vmatpush1.bf16.msra.mxu0 %v374
    %412 = vmatprep.subr.bf16.mxu0 0
    %413 = vmatpush2.bf16.msra.mxu0 0
    %414 = vmatprep.subr.bf16.mxu0 0
    %415 = vmatpush2.bf16.msra.mxu0 0
    %416 = vmatprep.subr.bf16.mxu0 0
    %417 = vmatpush2.bf16.msra.mxu0 0
    %418 = vmatprep.subr.bf16.mxu0 0
    %419 = vmatpush2.bf16.msra.mxu0 0
    %420 = vmatprep.subr.bf16.mxu0 0
    %421 = vmatpush2.bf16.msra.mxu0 0
    %422 = vmatprep.subr.bf16.mxu0 0
    %423 = vmatpush2.bf16.msra.mxu0 0
    %424 = vmatprep.subr.bf16.mxu0 0
    %425 = vmatpush2.bf16.msra.mxu0 0
    %426 = vmatprep.subr.bf16.mxu0 0
    %427 = vmatpush2.bf16.msra.mxu0 0
    %428 = vmatprep.mubr.bf16.mxu0 0
    %429 = vmatmul.mubr.bf16.gmra.mxu0 %v388
    %v430 = vpop.f32.mrf.mxu0
    %v431 = vadd.f32 0.0, %v430
    %v432 = vpop.f32.mrf.mxu0
    %v433 = vpop.f32.mrf.mxu0
    %v434 = vadd.f32 0.0, %v433
    %v435 = vpop.f32.mrf.mxu0
    %436 = vmatprep.mubr.bf16.mxu0 0
    %437 = vmatmul.mubr.bf16.gmra.mxu0 %v391
    %v438 = vpop.f32.mrf.mxu0
    %v439 = vadd.f32 0.0, %v438
    %v440 = vpop.f32.mrf.mxu0
    %v441 = vpop.f32.mrf.mxu0
    %v442 = vadd.f32 0.0, %v441
    %v443 = vpop.f32.mrf.mxu0
    %444 = vmatprep.mubr.bf16.mxu0 0
    %445 = vmatmul.mubr.bf16.gmra.mxu0 %v394
    %v446 = vpop.f32.mrf.mxu0
    %v447 = vadd.f32 0.0, %v446
    %v448 = vpop.f32.mrf.mxu0
    %v449 = vpop.f32.mrf.mxu0
    %v450 = vpop.f32.mrf.mxu0
    %451 = vdwg.mxu0
    %v464 = vunpack.c.l.b16 %v289
    %v465 = vunpack.c.l.b16 %v290
    %v466 = vunpack.c.l.b16 %v291
    %v467 = vunpack.c.l.b16 %v292
    %v468 = vunpack.c.l.b16 %v293
    %v469 = vunpack.c.l.b16 %v294
    %v470 = vunpack.c.l.b16 %v295
    %v471 = vunpack.c.l.b16 %v296
    %v472 = vunpack.c.l.b16 %v297
    %v473 = vunpack.c.l.b16 %v298
    %v474 = vunpack.c.l.b16 %v299
    %v475 = vunpack.c.l.b16 %v300
    %v476 = vpack.c.b16 %v465, %v464
    %v477 = vpack.c.b16 %v467, %v466
    %v478 = vpack.c.b16 %v469, %v468
    %v479 = vpack.c.b16 %v471, %v470
    %v480 = vpack.c.b16 %v473, %v472
    %v481 = vpack.c.b16 %v475, %v474
    %v488 = vsel %vm386, %v324, 0
    %v490 = vsel %vm386, %v325, 0
    %v492 = vsel %vm386, %v326, 0
    %494 = vmatprep.subr.bf16.mxu0 0
    %495 = vmatpush1.bf16.msra.mxu0 0
    %496 = vmatprep.subr.bf16.mxu0 0
    %497 = vmatpush1.bf16.msra.mxu0 0
    %498 = vmatprep.subr.bf16.mxu0 0
    %499 = vmatpush1.bf16.msra.mxu0 %v481
    %500 = vmatprep.subr.bf16.mxu0 0
    %501 = vmatpush1.bf16.msra.mxu0 %v480
    %502 = vmatprep.subr.bf16.mxu0 0
    %503 = vmatpush1.bf16.msra.mxu0 %v479
    %504 = vmatprep.subr.bf16.mxu0 0
    %505 = vmatpush1.bf16.msra.mxu0 %v478
    %506 = vmatprep.subr.bf16.mxu0 0
    %507 = vmatpush1.bf16.msra.mxu0 %v477
    %508 = vmatprep.subr.bf16.mxu0 0
    %509 = vmatpush1.bf16.msra.mxu0 %v476
    %510 = vmatprep.subr.bf16.mxu0 0
    %511 = vmatpush2.bf16.msra.mxu0 0
    %512 = vmatprep.subr.bf16.mxu0 0
    %513 = vmatpush2.bf16.msra.mxu0 0
    %514 = vmatprep.subr.bf16.mxu0 0
    %515 = vmatpush2.bf16.msra.mxu0 0
    %516 = vmatprep.subr.bf16.mxu0 0
    %517 = vmatpush2.bf16.msra.mxu0 0
    %518 = vmatprep.subr.bf16.mxu0 0
    %519 = vmatpush2.bf16.msra.mxu0 0
    %520 = vmatprep.subr.bf16.mxu0 0
    %521 = vmatpush2.bf16.msra.mxu0 0
    %522 = vmatprep.subr.bf16.mxu0 0
    %523 = vmatpush2.bf16.msra.mxu0 0
    %524 = vmatprep.subr.bf16.mxu0 0
    %525 = vmatpush2.bf16.msra.mxu0 0
    %526 = vmatprep.mubr.bf16.mxu0 0
    %527 = vmatmul.mubr.bf16.gmra.mxu0 %v488
    %v528 = vpop.f32.mrf.mxu0
    %v529 = vadd.f32 %v431, %v528
    %v530 = vpop.f32.mrf.mxu0
    %v531 = vpop.f32.mrf.mxu0
    %v532 = vadd.f32 %v434, %v531
    %v533 = vpop.f32.mrf.mxu0
    %534 = vmatprep.mubr.bf16.mxu0 0
    %535 = vmatmul.mubr.bf16.gmra.mxu0 %v490
    %v536 = vpop.f32.mrf.mxu0
    %v537 = vadd.f32 %v439, %v536
    %v538 = vpop.f32.mrf.mxu0
    %v539 = vpop.f32.mrf.mxu0
    %v540 = vadd.f32 %v442, %v539
    %v541 = vpop.f32.mrf.mxu0
    %542 = vmatprep.mubr.bf16.mxu0 0
    %543 = vmatmul.mubr.bf16.gmra.mxu0 %v492
    %v544 = vpop.f32.mrf.mxu0
    %v545 = vadd.f32 %v447, %v544
    %v546 = vpop.f32.mrf.mxu0
    %v547 = vpop.f32.mrf.mxu0
    %v548 = vpop.f32.mrf.mxu0
    %549 = vdwg.mxu0
    %v550 = vld [vmem:[#allocation2] sm:$0xe]
    %v551 = vld [vmem:[#allocation2 + $0x10] sm:$0x3]
    %s552 = scalar_lea.vmem %s3, 96
    %v553 = vld [vmem:[%s552] sm:$0xf]
    %v554 = vld [vmem:[%s552 + $0x4] sm:$0xf]
    %v555 = vld [vmem:[%s552 + $0x8] sm:$0xf]
    %v556 = vld [vmem:[%s552 + $0xc] sm:$0xf]
    %v557 = vld [vmem:[%s552 + $0x10] sm:$0xf]
    %v558 = vld [vmem:[%s552 + $0x14] sm:$0xf]
    %v559 = vld [vmem:[%s552 + $0x18] sm:$0xf]
    %v560 = vld [vmem:[%s552 + $0x1c] sm:$0xf]
    %v561 = vld [vmem:[%s552 + $0x20] sm:$0xf]
    %v562 = vld [vmem:[%s552 + $0x24] sm:$0xf]
    %v563 = vld [vmem:[%s552 + $0x28] sm:$0xf]
    %v564 = vld [vmem:[%s552 + $0x2c] sm:$0xf]
    %v567 = vunpack.c.l.b16 %v550
    %v568 = vunpack.c.l.b16 %v551
    %v569 = vpack.c.b16 %v320, %v567
    %v570 = vpack.c.b16 %v568, %v568
    %vm571 = vcmask 1046528
    %v572 = vrot.slane %v569, 1
    %v573 = vrot.slane %v325, 1
    %v574 = vsel %vm571, %v572, %v573
    %v575 = vrot.slane %v570, 1
    %v576 = vsel %vm571, %v573, %v575
    %v589 = vunpack.c.l.b16 %v553
    %v590 = vunpack.c.l.b16 %v554
    %v591 = vunpack.c.l.b16 %v555
    %v592 = vunpack.c.l.b16 %v556
    %v593 = vunpack.c.l.b16 %v557
    %v594 = vunpack.c.l.b16 %v558
    %v595 = vunpack.c.l.b16 %v559
    %v596 = vunpack.c.l.b16 %v560
    %v597 = vunpack.c.l.b16 %v561
    %v598 = vunpack.c.l.b16 %v562
    %v599 = vunpack.c.l.b16 %v563
    %v600 = vunpack.c.l.b16 %v564
    %v601 = vpack.c.b16 %v590, %v589
    %v602 = vpack.c.b16 %v592, %v591
    %v603 = vpack.c.b16 %v594, %v593
    %v604 = vpack.c.b16 %v596, %v595
    %v605 = vpack.c.b16 %v598, %v597
    %v606 = vpack.c.b16 %v600, %v599
    %v614 = vsel %vm386, %v574, 0
    %v617 = vsel %vm386, %v576, 0
    %v620 = vsel %vm386, %v575, 0
    %622 = vmatprep.subr.bf16.mxu0 0
    %623 = vmatpush1.bf16.msra.mxu0 0
    %624 = vmatprep.subr.bf16.mxu0 0
    %625 = vmatpush1.bf16.msra.mxu0 0
    %626 = vmatprep.subr.bf16.mxu0 0
    %627 = vmatpush1.bf16.msra.mxu0 %v606
    %628 = vmatprep.subr.bf16.mxu0 0
    %629 = vmatpush1.bf16.msra.mxu0 %v605
    %630 = vmatprep.subr.bf16.mxu0 0
    %631 = vmatpush1.bf16.msra.mxu0 %v604
    %632 = vmatprep.subr.bf16.mxu0 0
    %633 = vmatpush1.bf16.msra.mxu0 %v603
    %634 = vmatprep.subr.bf16.mxu0 0
    %635 = vmatpush1.bf16.msra.mxu0 %v602
    %636 = vmatprep.subr.bf16.mxu0 0
    %637 = vmatpush1.bf16.msra.mxu0 %v601
    %638 = vmatprep.subr.bf16.mxu0 0
    %639 = vmatpush2.bf16.msra.mxu0 0
    %640 = vmatprep.subr.bf16.mxu0 0
    %641 = vmatpush2.bf16.msra.mxu0 0
    %642 = vmatprep.subr.bf16.mxu0 0
    %643 = vmatpush2.bf16.msra.mxu0 0
    %644 = vmatprep.subr.bf16.mxu0 0
    %645 = vmatpush2.bf16.msra.mxu0 0
    %646 = vmatprep.subr.bf16.mxu0 0
    %647 = vmatpush2.bf16.msra.mxu0 0
    %648 = vmatprep.subr.bf16.mxu0 0
    %649 = vmatpush2.bf16.msra.mxu0 0
    %650 = vmatprep.subr.bf16.mxu0 0
    %651 = vmatpush2.bf16.msra.mxu0 0
    %652 = vmatprep.subr.bf16.mxu0 0
    %653 = vmatpush2.bf16.msra.mxu0 0
    %654 = vmatprep.mubr.bf16.mxu0 0
    %655 = vmatmul.mubr.bf16.gmra.mxu0 %v614
    %v656 = vpop.f32.mrf.mxu0
    %v657 = vadd.f32 0.0, %v656
    %v658 = vpop.f32.mrf.mxu0
    %v659 = vpop.f32.mrf.mxu0
    %v660 = vadd.f32 0.0, %v659
    %v661 = vpop.f32.mrf.mxu0
    %662 = vmatprep.mubr.bf16.mxu0 0
    %663 = vmatmul.mubr.bf16.gmra.mxu0 %v617
    %v664 = vpop.f32.mrf.mxu0
    %v665 = vadd.f32 0.0, %v664
    %v666 = vpop.f32.mrf.mxu0
    %v667 = vpop.f32.mrf.mxu0
    %v668 = vadd.f32 0.0, %v667
    %v669 = vpop.f32.mrf.mxu0
    %670 = vmatprep.mubr.bf16.mxu0 0
    %671 = vmatmul.mubr.bf16.gmra.mxu0 %v620
    %v672 = vpop.f32.mrf.mxu0
    %v673 = vadd.f32 0.0, %v672
    %v674 = vpop.f32.mrf.mxu0
    %v675 = vpop.f32.mrf.mxu0
    %v676 = vpop.f32.mrf.mxu0
    %677 = vdwg.mxu0
    %v678 = vadd.f32 %v529, %v657
    %v679 = vadd.f32 %v532, %v660
    %v680 = vadd.f32 %v537, %v665
    %v681 = vadd.f32 %v540, %v668
    %v682 = vadd.f32 %v545, %v673
    %v683 = vld [vmem:[%s4] sm:$0x1]
    %v685 = vlaneseq
    %v686 = vshrl.u32 %v685, 7
    %v687 = vsub.s32 0, %v686
    %v688 = vrot.slane %v683, %v687
    %v690 = vadd.f32 %v678, %v688
    %v691 = vadd.f32 %v679, %v688
    %v692 = vadd.f32 %v680, %v688
    %v693 = vadd.f32 %v681, %v688
    %v694 = vadd.f32 %v682, %v688
    %v695 = vmax.f32 %v690, 0.0
    %v696 = vmax.f32 %v691, 0.0
    %v697 = vmax.f32 %v692, 0.0
    %v698 = vmax.f32 %v693, 0.0
    %v699 = vmax.f32 %v694, 0.0
    %v700 = vpack.c.bf16 %v696, %v695
    %v701 = vpack.c.bf16 %v698, %v697
    %v702 = vpack.c.bf16 %v699, %v699
    %v706 = vunpack.c.l.b16 %v700
    %v707 = vunpack.c.h.b16 %v700
    %v708 = vunpack.c.l.b16 %v701
    %v709 = vunpack.c.h.b16 %v701
    %v710 = vunpack.c.l.b16 %v702
    %v711 = vpack.c.b16 %v706, %v706
    %v712 = vpack.c.b16 %v707, %v707
    %v713 = vpack.c.b16 %v708, %v708
    %v714 = vpack.c.b16 %v709, %v709
    %v715 = vpack.c.b16 %v710, %v710
    %v717 = vshrl.u32 %v711, 16
    %v719 = vrot.slane %v717, 7
    %v720 = vshll.u32 %v711, 16
    %v722 = vor.u32 %v719, %v720
    %v723 = vrot.slane %v719, 4
    %v725 = vshrl.u32 %v712, 16
    %v727 = vrot.slane %v725, 7
    %v728 = vshll.u32 %v712, 16
    %v730 = vor.u32 %v727, %v728
    %v731 = vsel %vm48, %v723, %v730
    %v732 = vrot.slane %v727, 4
    %v734 = vshrl.u32 %v713, 16
    %v736 = vrot.slane %v734, 7
    %v737 = vshll.u32 %v713, 16
    %v739 = vor.u32 %v736, %v737
    %v740 = vsel %vm48, %v732, %v739
    %v741 = vrot.slane %v736, 4
    %v743 = vshrl.u32 %v714, 16
    %v745 = vrot.slane %v743, 7
    %v746 = vshll.u32 %v714, 16
    %v748 = vor.u32 %v745, %v746
    %v749 = vsel %vm48, %v741, %v748
    %v750 = vrot.slane %v745, 4
    %v752 = vshll.u32 %v715, 16
    %v754 = vsel %vm48, %v750, %v752
    %v760 = vld [vmem:[#allocation3] sm:$0xf]
    %v761 = vsel %vm70, %v722, %v760
    %762 = vst [vmem:[#allocation3] sm:$0xf] %v761
    %763 = vst.msk [vmem:[#allocation3 + $0x4] sm:$0xf] %vm74, %v731
    %764 = vst.msk [vmem:[#allocation3 + $0x8] sm:$0xf] %vm74, %v740
    %765 = vst.msk [vmem:[#allocation3 + $0xc] sm:$0xf] %vm74, %v749
    %766 = vst.msk [vmem:[#allocation3 + $0x10] sm:$0x1] %vm201, %v754
    %v767 = vld [vmem:[#allocation3] sm:$0x1]
    %v768 = vsel %vm77, 0, %v767
    %769 = vst [vmem:[#allocation3] sm:$0x1] %v768
    %vm770 = vmand %vm76, %vm34
    %v771 = vld [vmem:[#allocation3 + $0x8] sm:$0x1]
    %v772 = vsel %vm770, 0, %v771
    %773 = vst [vmem:[#allocation3 + $0x8] sm:$0x1] %v772
    %vm774 = vcmask 517121
    %vm775 = vmand %vm774, %vm40
    %v776 = vld [vmem:[#allocation3 + $0x10] sm:$0x2]
    %v777 = vsel %vm775, 0, %v776
    %778 = vst [vmem:[#allocation3 + $0x10] sm:$0x2] %v777
    %v779 = vld [vmem:[#allocation3] sm:$0xf]
    %v780 = vld [vmem:[#allocation3 + $0x4] sm:$0xf]
    %v781 = vld [vmem:[#allocation3 + $0x8] sm:$0xf]
    %v782 = vld [vmem:[#allocation3 + $0xc] sm:$0xf]
    %v783 = vld [vmem:[#allocation3 + $0x10] sm:$0x1]
    %v784 = vld [vmem:[%s5] sm:$0xf]
    %v785 = vld [vmem:[%s5 + $0x4] sm:$0xf]
    %v786 = vld [vmem:[%s5 + $0x8] sm:$0xf]
    %v787 = vld [vmem:[%s5 + $0xc] sm:$0xf]
    %v788 = vld [vmem:[%s5 + $0x10] sm:$0xf]
    %v789 = vld [vmem:[%s5 + $0x14] sm:$0xf]
    %v790 = vld [vmem:[%s5 + $0x18] sm:$0xf]
    %v791 = vld [vmem:[%s5 + $0x1c] sm:$0xf]
    %s792 = scalar_lea.vmem %s5, 32
    %v793 = vld [vmem:[%s792] sm:$0xf]
    %v794 = vld [vmem:[%s792 + $0x4] sm:$0xf]
    %v795 = vld [vmem:[%s792 + $0x8] sm:$0xf]
    %v796 = vld [vmem:[%s792 + $0xc] sm:$0xf]
    %v797 = vld [vmem:[%s792 + $0x10] sm:$0xf]
    %v798 = vld [vmem:[%s792 + $0x14] sm:$0xf]
    %v799 = vld [vmem:[%s792 + $0x18] sm:$0xf]
    %v800 = vld [vmem:[%s792 + $0x1c] sm:$0xf]
    %v806 = vunpack.c.l.b16 %v779
    %v807 = vunpack.c.l.b16 %v780
    %v808 = vunpack.c.l.b16 %v781
    %v809 = vunpack.c.l.b16 %v782
    %v810 = vunpack.c.l.b16 %v783
    %v811 = vpack.c.b16 %v807, %v806
    %v812 = vpack.c.b16 %v809, %v808
    %v813 = vpack.c.b16 %v810, %v810
    %v815 = vshrl.u32 %v811, 16
    %v817 = vshll.u32 %v811, 16
    %v819 = vrot.slane %v817, 1
    %v820 = vor.u32 %v815, %v819
    %v822 = vshll.u32 %v812, 16
    %v824 = vrot.slane %v822, 1
    %v825 = vsel %vm327, %v820, %v824
    %v826 = vshrl.u32 %v812, 16
    %v828 = vor.u32 %v826, %v824
    %v830 = vshll.u32 %v813, 16
    %v832 = vrot.slane %v830, 1
    %v833 = vsel %vm327, %v828, %v832
    %v834 = vshrl.u32 %v813, 16
    %v844 = vunpack.c.l.b16 %v793
    %v845 = vunpack.c.l.b16 %v794
    %v846 = vunpack.c.l.b16 %v795
    %v847 = vunpack.c.l.b16 %v796
    %v848 = vunpack.c.l.b16 %v797
    %v849 = vunpack.c.l.b16 %v798
    %v850 = vunpack.c.l.b16 %v799
    %v851 = vunpack.c.l.b16 %v800
    %v852 = vpack.c.b16 %v845, %v844
    %v853 = vpack.c.b16 %v847, %v846
    %v854 = vpack.c.b16 %v849, %v848
    %v855 = vpack.c.b16 %v851, %v850
    %vm860 = vcmask 523264
    %v862 = vsel %vm860, %v825, 0
    %v865 = vsel %vm860, %v833, 0
    %v868 = vsel %vm860, %v834, 0
    %870 = vmatprep.subr.bf16.mxu0 0
    %871 = vmatpush1.bf16.msra.mxu0 0
    %872 = vmatprep.subr.bf16.mxu0 0
    %873 = vmatpush1.bf16.msra.mxu0 0
    %874 = vmatprep.subr.bf16.mxu0 0
    %875 = vmatpush1.bf16.msra.mxu0 0
    %876 = vmatprep.subr.bf16.mxu0 0
    %877 = vmatpush1.bf16.msra.mxu0 0
    %878 = vmatprep.subr.bf16.mxu0 0
    %879 = vmatpush1.bf16.msra.mxu0 %v855
    %880 = vmatprep.subr.bf16.mxu0 0
    %881 = vmatpush1.bf16.msra.mxu0 %v854
    %882 = vmatprep.subr.bf16.mxu0 0
    %883 = vmatpush1.bf16.msra.mxu0 %v853
    %884 = vmatprep.subr.bf16.mxu0 0
    %885 = vmatpush1.bf16.msra.mxu0 %v852
    %886 = vmatprep.subr.bf16.mxu0 0
    %887 = vmatpush2.bf16.msra.mxu0 0
    %888 = vmatprep.subr.bf16.mxu0 0
    %889 = vmatpush2.bf16.msra.mxu0 0
    %890 = vmatprep.subr.bf16.mxu0 0
    %891 = vmatpush2.bf16.msra.mxu0 0
    %892 = vmatprep.subr.bf16.mxu0 0
    %893 = vmatpush2.bf16.msra.mxu0 0
    %894 = vmatprep.subr.bf16.mxu0 0
    %895 = vmatpush2.bf16.msra.mxu0 0
    %896 = vmatprep.subr.bf16.mxu0 0
    %897 = vmatpush2.bf16.msra.mxu0 0
    %898 = vmatprep.subr.bf16.mxu0 0
    %899 = vmatpush2.bf16.msra.mxu0 0
    %900 = vmatprep.subr.bf16.mxu0 0
    %901 = vmatpush2.bf16.msra.mxu0 0
    %902 = vmatprep.mubr.bf16.mxu0 0
    %903 = vmatmul.mubr.bf16.gmra.mxu0 %v862
    %v904 = vpop.f32.mrf.mxu0
    %v905 = vadd.f32 0.0, %v904
    %v906 = vpop.f32.mrf.mxu0
    %v907 = vpop.f32.mrf.mxu0
    %v908 = vadd.f32 0.0, %v907
    %v909 = vpop.f32.mrf.mxu0
    %910 = vmatprep.mubr.bf16.mxu0 0
    %911 = vmatmul.mubr.bf16.gmra.mxu0 %v865
    %v912 = vpop.f32.mrf.mxu0
    %v913 = vadd.f32 0.0, %v912
    %v914 = vpop.f32.mrf.mxu0
    %v915 = vpop.f32.mrf.mxu0
    %v916 = vadd.f32 0.0, %v915
    %v917 = vpop.f32.mrf.mxu0
    %918 = vmatprep.mubr.bf16.mxu0 0
    %919 = vmatmul.mubr.bf16.gmra.mxu0 %v868
    %v920 = vpop.f32.mrf.mxu0
    %v921 = vadd.f32 0.0, %v920
    %v922 = vpop.f32.mrf.mxu0
    %v923 = vpop.f32.mrf.mxu0
    %v924 = vpop.f32.mrf.mxu0
    %925 = vdwg.mxu0
    %v934 = vunpack.c.l.b16 %v784
    %v935 = vunpack.c.l.b16 %v785
    %v936 = vunpack.c.l.b16 %v786
    %v937 = vunpack.c.l.b16 %v787
    %v938 = vunpack.c.l.b16 %v788
    %v939 = vunpack.c.l.b16 %v789
    %v940 = vunpack.c.l.b16 %v790
    %v941 = vunpack.c.l.b16 %v791
    %v942 = vpack.c.b16 %v935, %v934
    %v943 = vpack.c.b16 %v937, %v936
    %v944 = vpack.c.b16 %v939, %v938
    %v945 = vpack.c.b16 %v941, %v940
    %v950 = vsel %vm860, %v811, 0
    %v952 = vsel %vm860, %v812, 0
    %v954 = vsel %vm860, %v813, 0
    %956 = vmatprep.subr.bf16.mxu0 0
    %957 = vmatpush1.bf16.msra.mxu0 0
    %958 = vmatprep.subr.bf16.mxu0 0
    %959 = vmatpush1.bf16.msra.mxu0 0
    %960 = vmatprep.subr.bf16.mxu0 0
    %961 = vmatpush1.bf16.msra.mxu0 0
    %962 = vmatprep.subr.bf16.mxu0 0
    %963 = vmatpush1.bf16.msra.mxu0 0
    %964 = vmatprep.subr.bf16.mxu0 0
    %965 = vmatpush1.bf16.msra.mxu0 %v945
    %966 = vmatprep.subr.bf16.mxu0 0
    %967 = vmatpush1.bf16.msra.mxu0 %v944
    %968 = vmatprep.subr.bf16.mxu0 0
    %969 = vmatpush1.bf16.msra.mxu0 %v943
    %970 = vmatprep.subr.bf16.mxu0 0
    %971 = vmatpush1.bf16.msra.mxu0 %v942
    %972 = vmatprep.subr.bf16.mxu0 0
    %973 = vmatpush2.bf16.msra.mxu0 0
    %974 = vmatprep.subr.bf16.mxu0 0
    %975 = vmatpush2.bf16.msra.mxu0 0
    %976 = vmatprep.subr.bf16.mxu0 0
    %977 = vmatpush2.bf16.msra.mxu0 0
    %978 = vmatprep.subr.bf16.mxu0 0
    %979 = vmatpush2.bf16.msra.mxu0 0
    %980 = vmatprep.subr.bf16.mxu0 0
    %981 = vmatpush2.bf16.msra.mxu0 0
    %982 = vmatprep.subr.bf16.mxu0 0
    %983 = vmatpush2.bf16.msra.mxu0 0
    %984 = vmatprep.subr.bf16.mxu0 0
    %985 = vmatpush2.bf16.msra.mxu0 0
    %986 = vmatprep.subr.bf16.mxu0 0
    %987 = vmatpush2.bf16.msra.mxu0 0
    %988 = vmatprep.mubr.bf16.mxu0 0
    %989 = vmatmul.mubr.bf16.gmra.mxu0 %v950
    %v990 = vpop.f32.mrf.mxu0
    %v991 = vadd.f32 %v905, %v990
    %v992 = vpop.f32.mrf.mxu0
    %v993 = vpop.f32.mrf.mxu0
    %v994 = vadd.f32 %v908, %v993
    %v995 = vpop.f32.mrf.mxu0
    %996 = vmatprep.mubr.bf16.mxu0 0
    %997 = vmatmul.mubr.bf16.gmra.mxu0 %v952
    %v998 = vpop.f32.mrf.mxu0
    %v999 = vadd.f32 %v913, %v998
    %v1000 = vpop.f32.mrf.mxu0
    %v1001 = vpop.f32.mrf.mxu0
    %v1002 = vadd.f32 %v916, %v1001
    %v1003 = vpop.f32.mrf.mxu0
    %1004 = vmatprep.mubr.bf16.mxu0 0
    %1005 = vmatmul.mubr.bf16.gmra.mxu0 %v954
    %v1006 = vpop.f32.mrf.mxu0
    %v1007 = vadd.f32 %v921, %v1006
    %v1008 = vpop.f32.mrf.mxu0
    %v1009 = vpop.f32.mrf.mxu0
    %v1010 = vpop.f32.mrf.mxu0
    %1011 = vdwg.mxu0
    %v1012 = vld [vmem:[#allocation3] sm:$0xe]
    %v1013 = vld [vmem:[#allocation3 + $0x10] sm:$0x3]
    %s1014 = scalar_lea.vmem %s5, 64
    %v1015 = vld [vmem:[%s1014] sm:$0xf]
    %v1016 = vld [vmem:[%s1014 + $0x4] sm:$0xf]
    %v1017 = vld [vmem:[%s1014 + $0x8] sm:$0xf]
    %v1018 = vld [vmem:[%s1014 + $0xc] sm:$0xf]
    %v1019 = vld [vmem:[%s1014 + $0x10] sm:$0xf]
    %v1020 = vld [vmem:[%s1014 + $0x14] sm:$0xf]
    %v1021 = vld [vmem:[%s1014 + $0x18] sm:$0xf]
    %v1022 = vld [vmem:[%s1014 + $0x1c] sm:$0xf]
    %v1025 = vunpack.c.l.b16 %v1012
    %v1026 = vunpack.c.l.b16 %v1013
    %v1027 = vpack.c.b16 %v807, %v1025
    %v1028 = vpack.c.b16 %v1026, %v1026
    %v1029 = vrot.slane %v1027, 1
    %v1030 = vrot.slane %v812, 1
    %v1031 = vsel %vm571, %v1029, %v1030
    %v1032 = vrot.slane %v1028, 1
    %v1033 = vsel %vm571, %v1030, %v1032
    %v1042 = vunpack.c.l.b16 %v1015
    %v1043 = vunpack.c.l.b16 %v1016
    %v1044 = vunpack.c.l.b16 %v1017
    %v1045 = vunpack.c.l.b16 %v1018
    %v1046 = vunpack.c.l.b16 %v1019
    %v1047 = vunpack.c.l.b16 %v1020
    %v1048 = vunpack.c.l.b16 %v1021
    %v1049 = vunpack.c.l.b16 %v1022
    %v1050 = vpack.c.b16 %v1043, %v1042
    %v1051 = vpack.c.b16 %v1045, %v1044
    %v1052 = vpack.c.b16 %v1047, %v1046
    %v1053 = vpack.c.b16 %v1049, %v1048
    %v1059 = vsel %vm860, %v1031, 0
    %v1062 = vsel %vm860, %v1033, 0
    %v1065 = vsel %vm860, %v1032, 0
    %1067 = vmatprep.subr.bf16.mxu0 0
    %1068 = vmatpush1.bf16.msra.mxu0 0
    %1069 = vmatprep.subr.bf16.mxu0 0
    %1070 = vmatpush1.bf16.msra.mxu0 0
    %1071 = vmatprep.subr.bf16.mxu0 0
    %1072 = vmatpush1.bf16.msra.mxu0 0
    %1073 = vmatprep.subr.bf16.mxu0 0
    %1074 = vmatpush1.bf16.msra.mxu0 0
    %1075 = vmatprep.subr.bf16.mxu0 0
    %1076 = vmatpush1.bf16.msra.mxu0 %v1053
    %1077 = vmatprep.subr.bf16.mxu0 0
    %1078 = vmatpush1.bf16.msra.mxu0 %v1052
    %1079 = vmatprep.subr.bf16.mxu0 0
    %1080 = vmatpush1.bf16.msra.mxu0 %v1051
    %1081 = vmatprep.subr.bf16.mxu0 0
    %1082 = vmatpush1.bf16.msra.mxu0 %v1050
    %1083 = vmatprep.subr.bf16.mxu0 0
    %1084 = vmatpush2.bf16.msra.mxu0 0
    %1085 = vmatprep.subr.bf16.mxu0 0
    %1086 = vmatpush2.bf16.msra.mxu0 0
    %1087 = vmatprep.subr.bf16.mxu0 0
    %1088 = vmatpush2.bf16.msra.mxu0 0
    %1089 = vmatprep.subr.bf16.mxu0 0
    %1090 = vmatpush2.bf16.msra.mxu0 0
    %1091 = vmatprep.subr.bf16.mxu0 0
    %1092 = vmatpush2.bf16.msra.mxu0 0
    %1093 = vmatprep.subr.bf16.mxu0 0
    %1094 = vmatpush2.bf16.msra.mxu0 0
    %1095 = vmatprep.subr.bf16.mxu0 0
    %1096 = vmatpush2.bf16.msra.mxu0 0
    %1097 = vmatprep.subr.bf16.mxu0 0
    %1098 = vmatpush2.bf16.msra.mxu0 0
    %1099 = vmatprep.mubr.bf16.mxu0 0
    %1100 = vmatmul.mubr.bf16.gmra.mxu0 %v1059
    %v1101 = vpop.f32.mrf.mxu0
    %v1102 = vadd.f32 0.0, %v1101
    %v1103 = vpop.f32.mrf.mxu0
    %v1104 = vpop.f32.mrf.mxu0
    %v1105 = vadd.f32 0.0, %v1104
    %v1106 = vpop.f32.mrf.mxu0
    %1107 = vmatprep.mubr.bf16.mxu0 0
    %1108 = vmatmul.mubr.bf16.gmra.mxu0 %v1062
    %v1109 = vpop.f32.mrf.mxu0
    %v1110 = vadd.f32 0.0, %v1109
    %v1111 = vpop.f32.mrf.mxu0
    %v1112 = vpop.f32.mrf.mxu0
    %v1113 = vadd.f32 0.0, %v1112
    %v1114 = vpop.f32.mrf.mxu0
    %1115 = vmatprep.mubr.bf16.mxu0 0
    %1116 = vmatmul.mubr.bf16.gmra.mxu0 %v1065
    %v1117 = vpop.f32.mrf.mxu0
    %v1118 = vadd.f32 0.0, %v1117
    %v1119 = vpop.f32.mrf.mxu0
    %v1120 = vpop.f32.mrf.mxu0
    %v1121 = vpop.f32.mrf.mxu0
    %1122 = vdwg.mxu0
    %v1123 = vadd.f32 %v991, %v1102
    %v1124 = vadd.f32 %v994, %v1105
    %v1125 = vadd.f32 %v999, %v1110
    %v1126 = vadd.f32 %v1002, %v1113
    %v1127 = vadd.f32 %v1007, %v1118
    %v1128 = vld [vmem:[%s6] sm:$0x1]
    %v1130 = vlaneseq
    %v1131 = vshrl.u32 %v1130, 7
    %v1132 = vsub.s32 0, %v1131
    %v1133 = vrot.slane %v1128, %v1132
    %v1135 = vadd.f32 %v1123, %v1133
    %v1136 = vadd.f32 %v1124, %v1133
    %v1137 = vadd.f32 %v1125, %v1133
    %v1138 = vadd.f32 %v1126, %v1133
    %v1139 = vadd.f32 %v1127, %v1133
    %v1140 = vmax.f32 %v1135, 0.0
    %v1141 = vmax.f32 %v1136, 0.0
    %v1142 = vmax.f32 %v1137, 0.0
    %v1143 = vmax.f32 %v1138, 0.0
    %v1144 = vmax.f32 %v1139, 0.0
    %1145 = vst.msk [vmem:[#allocation4] sm:$0xff] %vm860, %v1140
    %1146 = vst.msk [vmem:[#allocation4 + $0x8] sm:$0xff] %vm860, %v1141
    %s1147 = scalar_lea.vmem [#allocation4], 16
    %vm1148 = vcmask 523265
    %1149 = vst.msk [vmem:[%s1147 - $0x1] sm:$0xfe] %vm1148, %v1142
    %1150 = vst.msk [vmem:[%s1147 + $0x7] sm:$0xff] %vm860, %v1143
    %1151 = vst.msk [vmem:[%s1147 + $0xf] sm:$0x1] %vm201, %v1144
    // Predicated region
    $region30: #{tpu_custom_call.1} parent=1 // pred_check
      _
    $region31: #{tpu_custom_call.1} parent=1 // pred_check_branch
      %1153 = sbr.rel (0) target = $region33
    $region32: #{tpu_custom_call.1} parent=1 // pred_region
      %s1155 = ssub.s32 512, 512
      %1156 = vsyncadd [#allocation5], %s1155
      %s1157 = sshll.u32 [#allocation4], 4
      %s1158 = int_to_ptr.vmem [resolvable:$true] %s1157
      %1163 = dma.vmem_to_hbm [thread:$0]  %s1158, 512, %s7, [#allocation5], 128, 128, 8
    $region33: #{tpu_custom_call.1} parent=1 // pred_fallthru
      _
    // Predicated region
    $region34: #{tpu_custom_call.1} parent=1 // pred_check
      _
    $region35: #{tpu_custom_call.1} parent=1 // pred_check_branch
      %1165 = sbr.rel (0) target = $region37
    $region36: #{tpu_custom_call.1} parent=1 // pred_region
      %1166 = dma.done [#allocation5], 512
    $region37: #{tpu_custom_call.1} parent=1 // pred_fallthru
      _
    %1167 = vsyncpa [#allocation5], 1

// kernel: tpu_custom_call.1
$region0: #{tpu_custom_call.1}
  #allocation0 [shape = 'u32[]', space=smem, size = 0x4, offset = 0x4, fixed_abs, tag = 'smem constant byte address 0x4 - core index']
  #allocation1 [shape = 'u32[144,128]{1,0:T(1,128)}', space=vmem, size = 0x12000, scoped, tag = 'internal scratch']
  #allocation2 [shape = 'bf16[35,96]{1,0:T(8,128)(2,1)}', space=vmem, size = 0x2800, scoped, tag = 'scratch operand']
  #allocation3 [shape = 'bf16[35,64]{1,0:T(8,128)(2,1)}', space=vmem, size = 0x2800, scoped, tag = 'scratch operand']
  %s0 = inlined_call_operand.vmem [shape: bf16[2,8,32], index: 0, kind: input, shape index: {}]
  %s1 = inlined_call_operand.vmem [shape: bf16[2,16,64], index: 1, kind: input, shape index: {}]
  %s2 = inlined_call_operand.vmem [shape: bf16[16,8], index: 2, kind: input, shape index: {}]
  %s3 = inlined_call_operand.vmem [shape: bf16[3,96,64], index: 3, kind: input, shape index: {}]
  %s4 = inlined_call_operand.vmem [shape: f32[1,64], index: 4, kind: input, shape index: {}]
  %s5 = inlined_call_operand.vmem [shape: bf16[3,64,64], index: 5, kind: input, shape index: {}]
  %s6 = inlined_call_operand.vmem [shape: f32[1,64], index: 6, kind: input, shape index: {}]
  %s7 = inlined_call_operand.hbm [shape: f32[2,16,64], index: 7, kind: output, shape index: {}]
  %s8 = sld [smem:[#allocation0]]
  $region38: #{tpu_custom_call.1} parent=0
    _
  %s10 = ssub.s32 1, %s8
  %s11 = scalar_select 0, %s10, %s8
  $region1: #{tpu_custom_call.1} parent=0
    #allocation4 [shape = 'u8[16384]{0}', space=vmem, size = 0x4000, scoped, tag = 'output window, operand 0, single buffered']
    #allocation5 [shape = 's32[1]{0}', space=sflag, size = 0x4, scoped, tag = 'scoped memory for tpu_custom_call.1']
    %12 = vsyncpa [#allocation5], 0
    // Predicated region
    $region2: #{tpu_custom_call.1} parent=1 // pred_check
      _
    $region3: #{tpu_custom_call.1} parent=1 // pred_check_branch
      %14 = sbr.rel (0) target = $region5
    $region4: #{tpu_custom_call.1} parent=1 // pred_region
      _
    $region5: #{tpu_custom_call.1} parent=1 // pred_fallthru
      _
    // Predicated region
    $region6: #{tpu_custom_call.1} parent=1 // pred_check
      _
    $region7: #{tpu_custom_call.1} parent=1 // pred_check_branch
      %16 = sbr.rel (0) target = $region9
    $region8: #{tpu_custom_call.1} parent=1 // pred_region
      _
    $region9: #{tpu_custom_call.1} parent=1 // pred_fallthru
      _
    // Predicated region
    $region10: #{tpu_custom_call.1} parent=1 // pred_check
      _
    $region11: #{tpu_custom_call.1} parent=1 // pred_check_branch
      %18 = sbr.rel (0) target = $region13
    $region12: #{tpu_custom_call.1} parent=1 // pred_region
      _
    $region13: #{tpu_custom_call.1} parent=1 // pred_fallthru
      _
    // Predicated region
    $region14: #{tpu_custom_call.1} parent=1 // pred_check
      _
    $region15: #{tpu_custom_call.1} parent=1 // pred_check_branch
      %20 = sbr.rel (0) target = $region17
    $region16: #{tpu_custom_call.1} parent=1 // pred_region
      _
    $region17: #{tpu_custom_call.1} parent=1 // pred_fallthru
      _
    // Predicated region
    $region18: #{tpu_custom_call.1} parent=1 // pred_check
      _
    $region19: #{tpu_custom_call.1} parent=1 // pred_check_branch
      %22 = sbr.rel (0) target = $region21
    $region20: #{tpu_custom_call.1} parent=1 // pred_region
      _
    $region21: #{tpu_custom_call.1} parent=1 // pred_fallthru
      _
    // Predicated region
    $region22: #{tpu_custom_call.1} parent=1 // pred_check
      _
    $region23: #{tpu_custom_call.1} parent=1 // pred_check_branch
      %24 = sbr.rel (0) target = $region25
    $region24: #{tpu_custom_call.1} parent=1 // pred_region
      _
    $region25: #{tpu_custom_call.1} parent=1 // pred_fallthru
      _
    // Predicated region
    $region26: #{tpu_custom_call.1} parent=1 // pred_check
      _
    $region27: #{tpu_custom_call.1} parent=1 // pred_check_branch
      %26 = sbr.rel (0) target = $region29
    $region28: #{tpu_custom_call.1} parent=1 // pred_region
      _
    $region29: #{tpu_custom_call.1} parent=1 // pred_fallthru
      _
    %vm28 = vcmask 778240
    %vm29 = vsmask.f32 256
    %vm30 = vmand %vm28, %vm29
    %v31 = vld [vmem:[#allocation2] sm:$0x1]
    %v32 = vsel %vm30, 0, %v31
    %33 = vst [vmem:[#allocation2] sm:$0x1] %v32
    %vm34 = vsmask.f32 7938
    %vm35 = vmand %vm28, %vm34
    %v36 = vld [vmem:[#allocation2 + $0x8] sm:$0x1]
    %v37 = vsel %vm35, 0, %v36
    %38 = vst [vmem:[#allocation2 + $0x8] sm:$0x1] %v37
    %vm39 = vcmask 779265
    %vm40 = vsmask.f32 1280
    %vm41 = vmand %vm39, %vm40
    %v42 = vld [vmem:[#allocation2 + $0x10] sm:$0x2]
    %v43 = vsel %vm41, 0, %v42
    %44 = vst [vmem:[#allocation2 + $0x10] sm:$0x2] %v43
    %v45 = vld [vmem:[%s1] sm:$0xf]
    %v46 = vld [vmem:[%s1 + $0x4] sm:$0xf]
    %vm47 = vsmask.f32 4368
    %vm48 = vmor %vm29, %vm47
    %v50 = vshrl.u32 %v45, 16
    %v52 = vrot.slane %v50, 7
    %v53 = vshll.u32 %v45, 16
    %v55 = vor.u32 %v52, %v53
    %v56 = vrot.slane %v52, 4
    %v58 = vshrl.u32 %v46, 16
    %v60 = vrot.slane %v58, 7
    %v61 = vshll.u32 %v46, 16
    %v63 = vor.u32 %v60, %v61
    %v64 = vsel %vm48, %v56, %v63
    %v65 = vrot.slane %v60, 4
    %vm69 = vcmask 519168
    %vm70 = vmand %vm69, %vm34
    %v71 = vld [vmem:[#allocation2] sm:$0xf]
    %v72 = vsel %vm70, %v55, %v71
    %73 = vst [vmem:[#allocation2] sm:$0xf] %v72
    %vm74 = vcmask 519168
    %75 = vst.msk [vmem:[#allocation2 + $0x4] sm:$0xf] %vm74, %v64
    %vm76 = vcmask 516096
    %vm77 = vmand %vm76, %vm29
    %v78 = vld [vmem:[#allocation2 + $0x8] sm:$0x1]
    %v79 = vsel %vm77, %v65, %v78
    %80 = vst [vmem:[#allocation2 + $0x8] sm:$0x1] %v79
    %v81 = vld [vmem:[%s2] sm:$0xf]
    %v82 = vld [vmem:[%s2 + $0x4] sm:$0xf]
    %v83 = vld [vmem:[%s0] sm:$0xf]
    %v86 = vunpack.c.l.b16 %v81
    %v87 = vunpack.c.l.b16 %v82
    %v88 = vpack.c.b16 %v87, %v86
    %vm89 = vcmask 64512
    %v91 = vsel %vm89, %v88, 0
    %vm93 = vcmask 1043456
    %v95 = vsel %vm93, %v83, 0
    %97 = vmatprep.subr.bf16.mxu0 0
    %98 = vmatpush1.bf16.msra.mxu0 0
    %99 = vmatprep.subr.bf16.mxu0 0
    %100 = vmatpush1.bf16.msra.mxu0 0
    %101 = vmatprep.subr.bf16.mxu0 0
    %102 = vmatpush1.bf16.msra.mxu0 0
    %103 = vmatprep.subr.bf16.mxu0 0
    %104 = vmatpush1.bf16.msra.mxu0 0
    %105 = vmatprep.subr.bf16.mxu0 0
    %106 = vmatpush1.bf16.msra.mxu0 0
    %107 = vmatprep.subr.bf16.mxu0 0
    %108 = vmatpush1.bf16.msra.mxu0 0
    %109 = vmatprep.subr.bf16.mxu0 0
    %110 = vmatpush1.bf16.msra.mxu0 0
    %111 = vmatprep.subr.bf16.mxu0 0
    %112 = vmatpush1.bf16.msra.mxu0 %v95
    %113 = vmatprep.subr.bf16.mxu0 0
    %114 = vmatpush2.bf16.msra.mxu0 0
    %115 = vmatprep.subr.bf16.mxu0 0
    %116 = vmatpush2.bf16.msra.mxu0 0
    %117 = vmatprep.subr.bf16.mxu0 0
    %118 = vmatpush2.bf16.msra.mxu0 0
    %119 = vmatprep.subr.bf16.mxu0 0
    %120 = vmatpush2.bf16.msra.mxu0 0
    %121 = vmatprep.subr.bf16.mxu0 0
    %122 = vmatpush2.bf16.msra.mxu0 0
    %123 = vmatprep.subr.bf16.mxu0 0
    %124 = vmatpush2.bf16.msra.mxu0 0
    %125 = vmatprep.subr.bf16.mxu0 0
    %126 = vmatpush2.bf16.msra.mxu0 0
    %127 = vmatprep.subr.bf16.mxu0 0
    %128 = vmatpush2.bf16.msra.mxu0 0
    %129 = vmatprep.mubr.bf16.mxu0 0
    %130 = vmatmul.mubr.bf16.gmra.mxu0 %v91
    %v131 = vpop.f32.mrf.mxu0
    %v132 = vadd.f32 0.0, %v131
    %v133 = vpop.f32.mrf.mxu0
    %v134 = vpop.f32.mrf.mxu0
    %v135 = vadd.f32 0.0, %v134
    %v136 = vpop.f32.mrf.mxu0
    %137 = vdwg.mxu0
    %v138 = vpack.c.bf16 %v135, %v132
    %v140 = vunpack.c.l.b16 %v138
    %v141 = vunpack.c.h.b16 %v138
    %v142 = vpack.c.b16 %v140, %v140
    %v143 = vpack.c.b16 %v141, %v141
    %v145 = vshrl.u32 %v142, 16
    %v147 = vrot.slane %v145, 7
    %v148 = vshll.u32 %v142, 16
    %v150 = vor.u32 %v147, %v148
    %v151 = vrot.slane %v147, 4
    %v153 = vshrl.u32 %v143, 16
    %v155 = vrot.slane %v153, 7
    %v156 = vshll.u32 %v143, 16
    %v158 = vor.u32 %v155, %v156
    %v159 = vsel %vm48, %v151, %v158
    %v160 = vrot.slane %v155, 4
    %161 = vrot.lane.b32.xlu0 %v150, 64
    %v162 = vpop.permute.xlu0 %161
    %163 = vrot.lane.b32.xlu0 %v159, 64
    %v164 = vpop.permute.xlu0 %163
    %165 = vrot.lane.b32.xlu0 %v160, 64
    %v166 = vpop.permute.xlu0 %165
    %vm170 = vcmask 781824
    %vm171 = vmand %vm170, %vm34
    %v172 = vld [vmem:[#allocation2] sm:$0xf]
    %v173 = vsel %vm171, %v162, %v172
    %174 = vst [vmem:[#allocation2] sm:$0xf] %v173
    %vm175 = vcmask 781824
    %176 = vst.msk [vmem:[#allocation2 + $0x4] sm:$0xf] %vm175, %v164
    %vm177 = vcmask 778752
    %vm178 = vmand %vm177, %vm29
    %v179 = vld [vmem:[#allocation2 + $0x8] sm:$0x1]
    %v180 = vsel %vm178, %v166, %v179
    %181 = vst [vmem:[#allocation2 + $0x8] sm:$0x1] %v180
    %s182 = scalar_lea.vmem %s1, 8
    %v183 = vld [vmem:[%s182] sm:$0xf]
    %v184 = vld [vmem:[%s182 + $0x4] sm:$0xf]
    %vm187 = vcmask 1040384
    %vm188 = vcmask 1044484
    %vm189 = vmor %vm187, %vm188
    %v190 = vrot.slane %v183, 7
    %v191 = vrot.slane %v190, 4
    %v192 = vrot.slane %v184, 7
    %v193 = vsel %vm189, %v191, %v192
    %v194 = vrot.slane %v192, 4
    %vm198 = vcmask 519169
    %199 = vst.msk [vmem:[#allocation2 + $0x8] sm:$0xe] %vm198, %v190
    %200 = vst.msk [vmem:[#allocation2 + $0xc] sm:$0xf] %vm74, %v193
    %vm201 = vcmask 516096
    %202 = vst.msk [vmem:[#allocation2 + $0x10] sm:$0x1] %vm201, %v194
    %v203 = vld [vmem:[%s2] sm:$0xf]
    %v204 = vld [vmem:[%s2 + $0x4] sm:$0xf]
    %s205 = scalar_lea.vmem %s0, 4
    %v206 = vld [vmem:[%s205] sm:$0xf]
    %v209 = vunpack.c.l.b16 %v203
    %v210 = vunpack.c.l.b16 %v204
    %v211 = vpack.c.b16 %v210, %v209
    %v213 = vsel %vm89, %v211, 0
    %v216 = vsel %vm93, %v206, 0
    %218 = vmatprep.subr.bf16.mxu0 0
    %219 = vmatpush1.bf16.msra.mxu0 0
    %220 = vmatprep.subr.bf16.mxu0 0
    %221 = vmatpush1.bf16.msra.mxu0 0
    %222 = vmatprep.subr.bf16.mxu0 0
    %223 = vmatpush1.bf16.msra.mxu0 0
    %224 = vmatprep.subr.bf16.mxu0 0
    %225 = vmatpush1.bf16.msra.mxu0 0
    %226 = vmatprep.subr.bf16.mxu0 0
    %227 = vmatpush1.bf16.msra.mxu0 0
    %228 = vmatprep.subr.bf16.mxu0 0
    %229 = vmatpush1.bf16.msra.mxu0 0
    %230 = vmatprep.subr.bf16.mxu0 0
    %231 = vmatpush1.bf16.msra.mxu0 0
    %232 = vmatprep.subr.bf16.mxu0 0
    %233 = vmatpush1.bf16.msra.mxu0 %v216
    %234 = vmatprep.subr.bf16.mxu0 0
    %235 = vmatpush2.bf16.msra.mxu0 0
    %236 = vmatprep.subr.bf16.mxu0 0
    %237 = vmatpush2.bf16.msra.mxu0 0
    %238 = vmatprep.subr.bf16.mxu0 0
    %239 = vmatpush2.bf16.msra.mxu0 0
    %240 = vmatprep.subr.bf16.mxu0 0
    %241 = vmatpush2.bf16.msra.mxu0 0
    %242 = vmatprep.subr.bf16.mxu0 0
    %243 = vmatpush2.bf16.msra.mxu0 0
    %244 = vmatprep.subr.bf16.mxu0 0
    %245 = vmatpush2.bf16.msra.mxu0 0
    %246 = vmatprep.subr.bf16.mxu0 0
    %247 = vmatpush2.bf16.msra.mxu0 0
    %248 = vmatprep.subr.bf16.mxu0 0
    %249 = vmatpush2.bf16.msra.mxu0 0
    %250 = vmatprep.mubr.bf16.mxu0 0
    %251 = vmatmul.mubr.bf16.gmra.mxu0 %v213
    %v252 = vpop.f32.mrf.mxu0
    %v253 = vadd.f32 0.0, %v252
    %v254 = vpop.f32.mrf.mxu0
    %v255 = vpop.f32.mrf.mxu0
    %v256 = vadd.f32 0.0, %v255
    %v257 = vpop.f32.mrf.mxu0
    %258 = vdwg.mxu0
    %v259 = vpack.c.bf16 %v256, %v253
    %v261 = vunpack.c.l.b16 %v259
    %v262 = vunpack.c.h.b16 %v259
    %v263 = vpack.c.b16 %v261, %v261
    %v264 = vpack.c.b16 %v262, %v262
    %v265 = vrot.slane %v263, 7
    %v266 = vrot.slane %v265, 4
    %v267 = vrot.slane %v264, 7
    %v268 = vsel %vm189, %v266, %v267
    %v269 = vrot.slane %v267, 4
    %270 = vrot.lane.b32.xlu0 %v265, 64
    %v271 = vpop.permute.xlu0 %270
    %272 = vrot.lane.b32.xlu0 %v268, 64
    %v273 = vpop.permute.xlu0 %272
    %274 = vrot.lane.b32.xlu0 %v269, 64
    %v275 = vpop.permute.xlu0 %274
    %vm279 = vcmask 781825
    %280 = vst.msk [vmem:[#allocation2 + $0x8] sm:$0xe] %vm279, %v271
    %281 = vst.msk [vmem:[#allocation2 + $0xc] sm:$0xf] %vm175, %v273
    %vm282 = vcmask 778752
    %283 = vst.msk [vmem:[#allocation2 + $0x10] sm:$0x1] %vm282, %v275
    %v284 = vld [vmem:[#allocation2] sm:$0xf]
    %v285 = vld [vmem:[#allocation2 + $0x4] sm:$0xf]
    %v286 = vld [vmem:[#allocation2 + $0x8] sm:$0xf]
    %v287 = vld [vmem:[#allocation2 + $0xc] sm:$0xf]
    %v288 = vld [vmem:[#allocation2 + $0x10] sm:$0x1]
    %v289 = vld [vmem:[%s3] sm:$0xf]
    %v290 = vld [vmem:[%s3 + $0x4] sm:$0xf]
    %v291 = vld [vmem:[%s3 + $0x8] sm:$0xf]
    %v292 = vld [vmem:[%s3 + $0xc] sm:$0xf]
    %v293 = vld [vmem:[%s3 + $0x10] sm:$0xf]
    %v294 = vld [vmem:[%s3 + $0x14] sm:$0xf]
    %v295 = vld [vmem:[%s3 + $0x18] sm:$0xf]
    %v296 = vld [vmem:[%s3 + $0x1c] sm:$0xf]
    %v297 = vld [vmem:[%s3 + $0x20] sm:$0xf]
    %v298 = vld [vmem:[%s3 + $0x24] sm:$0xf]
    %v299 = vld [vmem:[%s3 + $0x28] sm:$0xf]
    %v300 = vld [vmem:[%s3 + $0x2c] sm:$0xf]
    %s301 = scalar_lea.vmem %s3, 48
    %v302 = vld [vmem:[%s301] sm:$0xf]
    %v303 = vld [vmem:[%s301 + $0x4] sm:$0xf]
    %v304 = vld [vmem:[%s301 + $0x8] sm:$0xf]
    %v305 = vld [vmem:[%s301 + $0xc] sm:$0xf]
    %v306 = vld [vmem:[%s301 + $0x10] sm:$0xf]
    %v307 = vld [vmem:[%s301 + $0x14] sm:$0xf]
    %v308 = vld [vmem:[%s301 + $0x18] sm:$0xf]
    %v309 = vld [vmem:[%s301 + $0x1c] sm:$0xf]
    %v310 = vld [vmem:[%s301 + $0x20] sm:$0xf]
    %v311 = vld [vmem:[%s301 + $0x24] sm:$0xf]
    %v312 = vld [vmem:[%s301 + $0x28] sm:$0xf]
    %v313 = vld [vmem:[%s301 + $0x2c] sm:$0xf]
    %v319 = vunpack.c.l.b16 %v284
    %v320 = vunpack.c.l.b16 %v285
    %v321 = vunpack.c.l.b16 %v286
    %v322 = vunpack.c.l.b16 %v287
    %v323 = vunpack.c.l.b16 %v288
    %v324 = vpack.c.b16 %v320, %v319
    %v325 = vpack.c.b16 %v322, %v321
    %v326 = vpack.c.b16 %v323, %v323
    %vm327 = vsmask.f32 7424
    %v329 = vshrl.u32 %v324, 16
    %v331 = vshll.u32 %v324, 16
    %v333 = vrot.slane %v331, 1
    %v334 = vor.u32 %v329, %v333
    %v336 = vshll.u32 %v325, 16
    %v338 = vrot.slane %v336, 1
    %v339 = vsel %vm327, %v334, %v338
    %v340 = vshrl.u32 %v325, 16
    %v342 = vor.u32 %v340, %v338
    %v344 = vshll.u32 %v326, 16
    %v346 = vrot.slane %v344, 1
    %v347 = vsel %vm327, %v342, %v346
    %v348 = vshrl.u32 %v326, 16
    %v362 = vunpack.c.l.b16 %v302
    %v363 = vunpack.c.l.b16 %v303
    %v364 = vunpack.c.l.b16 %v304
    %v365 = vunpack.c.l.b16 %v305
    %v366 = vunpack.c.l.b16 %v306
    %v367 = vunpack.c.l.b16 %v307
    %v368 = vunpack.c.l.b16 %v308
    %v369 = vunpack.c.l.b16 %v309
    %v370 = vunpack.c.l.b16 %v310
    %v371 = vunpack.c.l.b16 %v311
    %v372 = vunpack.c.l.b16 %v312
    %v373 = vunpack.c.l.b16 %v313
    %v374 = vpack.c.b16 %v363, %v362
    %v375 = vpack.c.b16 %v365, %v364
    %v376 = vpack.c.b16 %v367, %v366
    %v377 = vpack.c.b16 %v369, %v368
    %v378 = vpack.c.b16 %v371, %v370
    %v379 = vpack.c.b16 %v373, %v372
    %vm386 = vcmask 785408
    %v388 = vsel %vm386, %v339, 0
    %v391 = vsel %vm386, %v347, 0
    %v394 = vsel %vm386, %v348, 0
    %396 = vmatprep.subr.bf16.mxu0 0
    %397 = vmatpush1.bf16.msra.mxu0 0
    %398 = vmatprep.subr.bf16.mxu0 0
    %399 = vmatpush1.bf16.msra.mxu0 0
    %400 = vmatprep.subr.bf16.mxu0 0
    %401 = vmatpush1.bf16.msra.mxu0 %v379
    %402 = vmatprep.subr.bf16.mxu0 0
    %403 = vmatpush1.bf16.msra.mxu0 %v378
    %404 = vmatprep.subr.bf16.mxu0 0
    %405 = vmatpush1.bf16.msra.mxu0 %v377
    %406 = vmatprep.subr.bf16.mxu0 0
    %407 = vmatpush1.bf16.msra.mxu0 %v376
    %408 = vmatprep.subr.bf16.mxu0 0
    %409 = vmatpush1.bf16.msra.mxu0 %v375
    %410 = vmatprep.subr.bf16.mxu0 0
    %411 = vmatpush1.bf16.msra.mxu0 %v374
    %412 = vmatprep.subr.bf16.mxu0 0
    %413 = vmatpush2.bf16.msra.mxu0 0
    %414 = vmatprep.subr.bf16.mxu0 0
    %415 = vmatpush2.bf16.msra.mxu0 0
    %416 = vmatprep.subr.bf16.mxu0 0
    %417 = vmatpush2.bf16.msra.mxu0 0
    %418 = vmatprep.subr.bf16.mxu0 0
    %419 = vmatpush2.bf16.msra.mxu0 0
    %420 = vmatprep.subr.bf16.mxu0 0
    %421 = vmatpush2.bf16.msra.mxu0 0
    %422 = vmatprep.subr.bf16.mxu0 0
    %423 = vmatpush2.bf16.msra.mxu0 0
    %424 = vmatprep.subr.bf16.mxu0 0
    %425 = vmatpush2.bf16.msra.mxu0 0
    %426 = vmatprep.subr.bf16.mxu0 0
    %427 = vmatpush2.bf16.msra.mxu0 0
    %428 = vmatprep.mubr.bf16.mxu0 0
    %429 = vmatmul.mubr.bf16.gmra.mxu0 %v388
    %v430 = vpop.f32.mrf.mxu0
    %v431 = vadd.f32 0.0, %v430
    %v432 = vpop.f32.mrf.mxu0
    %v433 = vpop.f32.mrf.mxu0
    %v434 = vadd.f32 0.0, %v433
    %v435 = vpop.f32.mrf.mxu0
    %436 = vmatprep.mubr.bf16.mxu0 0
    %437 = vmatmul.mubr.bf16.gmra.mxu0 %v391
    %v438 = vpop.f32.mrf.mxu0
    %v439 = vadd.f32 0.0, %v438
    %v440 = vpop.f32.mrf.mxu0
    %v441 = vpop.f32.mrf.mxu0
    %v442 = vadd.f32 0.0, %v441
    %v443 = vpop.f32.mrf.mxu0
    %444 = vmatprep.mubr.bf16.mxu0 0
    %445 = vmatmul.mubr.bf16.gmra.mxu0 %v394
    %v446 = vpop.f32.mrf.mxu0
    %v447 = vadd.f32 0.0, %v446
    %v448 = vpop.f32.mrf.mxu0
    %v449 = vpop.f32.mrf.mxu0
    %v450 = vpop.f32.mrf.mxu0
    %451 = vdwg.mxu0
    %v464 = vunpack.c.l.b16 %v289
    %v465 = vunpack.c.l.b16 %v290
    %v466 = vunpack.c.l.b16 %v291
    %v467 = vunpack.c.l.b16 %v292
    %v468 = vunpack.c.l.b16 %v293
    %v469 = vunpack.c.l.b16 %v294
    %v470 = vunpack.c.l.b16 %v295
    %v471 = vunpack.c.l.b16 %v296
    %v472 = vunpack.c.l.b16 %v297
    %v473 = vunpack.c.l.b16 %v298
    %v474 = vunpack.c.l.b16 %v299
    %v475 = vunpack.c.l.b16 %v300
    %v476 = vpack.c.b16 %v465, %v464
    %v477 = vpack.c.b16 %v467, %v466
    %v478 = vpack.c.b16 %v469, %v468
    %v479 = vpack.c.b16 %v471, %v470
    %v480 = vpack.c.b16 %v473, %v472
    %v481 = vpack.c.b16 %v475, %v474
    %v488 = vsel %vm386, %v324, 0
    %v490 = vsel %vm386, %v325, 0
    %v492 = vsel %vm386, %v326, 0
    %494 = vmatprep.subr.bf16.mxu0 0
    %495 = vmatpush1.bf16.msra.mxu0 0
    %496 = vmatprep.subr.bf16.mxu0 0
    %497 = vmatpush1.bf16.msra.mxu0 0
    %498 = vmatprep.subr.bf16.mxu0 0
    %499 = vmatpush1.bf16.msra.mxu0 %v481
    %500 = vmatprep.subr.bf16.mxu0 0
    %501 = vmatpush1.bf16.msra.mxu0 %v480
    %502 = vmatprep.subr.bf16.mxu0 0
    %503 = vmatpush1.bf16.msra.mxu0 %v479
    %504 = vmatprep.subr.bf16.mxu0 0
    %505 = vmatpush1.bf16.msra.mxu0 %v478
    %506 = vmatprep.subr.bf16.mxu0 0
    %507 = vmatpush1.bf16.msra.mxu0 %v477
    %508 = vmatprep.subr.bf16.mxu0 0
    %509 = vmatpush1.bf16.msra.mxu0 %v476
    %510 = vmatprep.subr.bf16.mxu0 0
    %511 = vmatpush2.bf16.msra.mxu0 0
    %512 = vmatprep.subr.bf16.mxu0 0
    %513 = vmatpush2.bf16.msra.mxu0 0
    %514 = vmatprep.subr.bf16.mxu0 0
    %515 = vmatpush2.bf16.msra.mxu0 0
    %516 = vmatprep.subr.bf16.mxu0 0
    %517 = vmatpush2.bf16.msra.mxu0 0
    %518 = vmatprep.subr.bf16.mxu0 0
    %519 = vmatpush2.bf16.msra.mxu0 0
    %520 = vmatprep.subr.bf16.mxu0 0
    %521 = vmatpush2.bf16.msra.mxu0 0
    %522 = vmatprep.subr.bf16.mxu0 0
    %523 = vmatpush2.bf16.msra.mxu0 0
    %524 = vmatprep.subr.bf16.mxu0 0
    %525 = vmatpush2.bf16.msra.mxu0 0
    %526 = vmatprep.mubr.bf16.mxu0 0
    %527 = vmatmul.mubr.bf16.gmra.mxu0 %v488
    %v528 = vpop.f32.mrf.mxu0
    %v529 = vadd.f32 %v431, %v528
    %v530 = vpop.f32.mrf.mxu0
    %v531 = vpop.f32.mrf.mxu0
    %v532 = vadd.f32 %v434, %v531
    %v533 = vpop.f32.mrf.mxu0
    %534 = vmatprep.mubr.bf16.mxu0 0
    %535 = vmatmul.mubr.bf16.gmra.mxu0 %v490
    %v536 = vpop.f32.mrf.mxu0
    %v537 = vadd.f32 %v439, %v536
    %v538 = vpop.f32.mrf.mxu0
    %v539 = vpop.f32.mrf.mxu0
    %v540 = vadd.f32 %v442, %v539
    %v541 = vpop.f32.mrf.mxu0
    %542 = vmatprep.mubr.bf16.mxu0 0
    %543 = vmatmul.mubr.bf16.gmra.mxu0 %v492
    %v544 = vpop.f32.mrf.mxu0
    %v545 = vadd.f32 %v447, %v544
    %v546 = vpop.f32.mrf.mxu0
    %v547 = vpop.f32.mrf.mxu0
    %v548 = vpop.f32.mrf.mxu0
    %549 = vdwg.mxu0
    %v550 = vld [vmem:[#allocation2] sm:$0xe]
    %v551 = vld [vmem:[#allocation2 + $0x10] sm:$0x3]
    %s552 = scalar_lea.vmem %s3, 96
    %v553 = vld [vmem:[%s552] sm:$0xf]
    %v554 = vld [vmem:[%s552 + $0x4] sm:$0xf]
    %v555 = vld [vmem:[%s552 + $0x8] sm:$0xf]
    %v556 = vld [vmem:[%s552 + $0xc] sm:$0xf]
    %v557 = vld [vmem:[%s552 + $0x10] sm:$0xf]
    %v558 = vld [vmem:[%s552 + $0x14] sm:$0xf]
    %v559 = vld [vmem:[%s552 + $0x18] sm:$0xf]
    %v560 = vld [vmem:[%s552 + $0x1c] sm:$0xf]
    %v561 = vld [vmem:[%s552 + $0x20] sm:$0xf]
    %v562 = vld [vmem:[%s552 + $0x24] sm:$0xf]
    %v563 = vld [vmem:[%s552 + $0x28] sm:$0xf]
    %v564 = vld [vmem:[%s552 + $0x2c] sm:$0xf]
    %v567 = vunpack.c.l.b16 %v550
    %v568 = vunpack.c.l.b16 %v551
    %v569 = vpack.c.b16 %v320, %v567
    %v570 = vpack.c.b16 %v568, %v568
    %vm571 = vcmask 1046528
    %v572 = vrot.slane %v569, 1
    %v573 = vrot.slane %v325, 1
    %v574 = vsel %vm571, %v572, %v573
    %v575 = vrot.slane %v570, 1
    %v576 = vsel %vm571, %v573, %v575
    %v589 = vunpack.c.l.b16 %v553
    %v590 = vunpack.c.l.b16 %v554
    %v591 = vunpack.c.l.b16 %v555
    %v592 = vunpack.c.l.b16 %v556
    %v593 = vunpack.c.l.b16 %v557
    %v594 = vunpack.c.l.b16 %v558
    %v595 = vunpack.c.l.b16 %v559
    %v596 = vunpack.c.l.b16 %v560
    %v597 = vunpack.c.l.b16 %v561
    %v598 = vunpack.c.l.b16 %v562
    %v599 = vunpack.c.l.b16 %v563
    %v600 = vunpack.c.l.b16 %v564
    %v601 = vpack.c.b16 %v590, %v589
    %v602 = vpack.c.b16 %v592, %v591
    %v603 = vpack.c.b16 %v594, %v593
    %v604 = vpack.c.b16 %v596, %v595
    %v605 = vpack.c.b16 %v598, %v597
    %v606 = vpack.c.b16 %v600, %v599
    %v614 = vsel %vm386, %v574, 0
    %v617 = vsel %vm386, %v576, 0
    %v620 = vsel %vm386, %v575, 0
    %622 = vmatprep.subr.bf16.mxu0 0
    %623 = vmatpush1.bf16.msra.mxu0 0
    %624 = vmatprep.subr.bf16.mxu0 0
    %625 = vmatpush1.bf16.msra.mxu0 0
    %626 = vmatprep.subr.bf16.mxu0 0
    %627 = vmatpush1.bf16.msra.mxu0 %v606
    %628 = vmatprep.subr.bf16.mxu0 0
    %629 = vmatpush1.bf16.msra.mxu0 %v605
    %630 = vmatprep.subr.bf16.mxu0 0
    %631 = vmatpush1.bf16.msra.mxu0 %v604
    %632 = vmatprep.subr.bf16.mxu0 0
    %633 = vmatpush1.bf16.msra.mxu0 %v603
    %634 = vmatprep.subr.bf16.mxu0 0
    %635 = vmatpush1.bf16.msra.mxu0 %v602
    %636 = vmatprep.subr.bf16.mxu0 0
    %637 = vmatpush1.bf16.msra.mxu0 %v601
    %638 = vmatprep.subr.bf16.mxu0 0
    %639 = vmatpush2.bf16.msra.mxu0 0
    %640 = vmatprep.subr.bf16.mxu0 0
    %641 = vmatpush2.bf16.msra.mxu0 0
    %642 = vmatprep.subr.bf16.mxu0 0
    %643 = vmatpush2.bf16.msra.mxu0 0
    %644 = vmatprep.subr.bf16.mxu0 0
    %645 = vmatpush2.bf16.msra.mxu0 0
    %646 = vmatprep.subr.bf16.mxu0 0
    %647 = vmatpush2.bf16.msra.mxu0 0
    %648 = vmatprep.subr.bf16.mxu0 0
    %649 = vmatpush2.bf16.msra.mxu0 0
    %650 = vmatprep.subr.bf16.mxu0 0
    %651 = vmatpush2.bf16.msra.mxu0 0
    %652 = vmatprep.subr.bf16.mxu0 0
    %653 = vmatpush2.bf16.msra.mxu0 0
    %654 = vmatprep.mubr.bf16.mxu0 0
    %655 = vmatmul.mubr.bf16.gmra.mxu0 %v614
    %v656 = vpop.f32.mrf.mxu0
    %v657 = vadd.f32 0.0, %v656
    %v658 = vpop.f32.mrf.mxu0
    %v659 = vpop.f32.mrf.mxu0
    %v660 = vadd.f32 0.0, %v659
    %v661 = vpop.f32.mrf.mxu0
    %662 = vmatprep.mubr.bf16.mxu0 0
    %663 = vmatmul.mubr.bf16.gmra.mxu0 %v617
    %v664 = vpop.f32.mrf.mxu0
    %v665 = vadd.f32 0.0, %v664
    %v666 = vpop.f32.mrf.mxu0
    %v667 = vpop.f32.mrf.mxu0
    %v668 = vadd.f32 0.0, %v667
    %v669 = vpop.f32.mrf.mxu0
    %670 = vmatprep.mubr.bf16.mxu0 0
    %671 = vmatmul.mubr.bf16.gmra.mxu0 %v620
    %v672 = vpop.f32.mrf.mxu0
    %v673 = vadd.f32 0.0, %v672
    %v674 = vpop.f32.mrf.mxu0
    %v675 = vpop.f32.mrf.mxu0
    %v676 = vpop.f32.mrf.mxu0
    %677 = vdwg.mxu0
    %v678 = vadd.f32 %v529, %v657
    %v679 = vadd.f32 %v532, %v660
    %v680 = vadd.f32 %v537, %v665
    %v681 = vadd.f32 %v540, %v668
    %v682 = vadd.f32 %v545, %v673
    %v683 = vld [vmem:[%s4] sm:$0x1]
    %v685 = vlaneseq
    %v686 = vshrl.u32 %v685, 7
    %v687 = vsub.s32 0, %v686
    %v688 = vrot.slane %v683, %v687
    %v690 = vadd.f32 %v678, %v688
    %v691 = vadd.f32 %v679, %v688
    %v692 = vadd.f32 %v680, %v688
    %v693 = vadd.f32 %v681, %v688
    %v694 = vadd.f32 %v682, %v688
    %v695 = vmax.f32 %v690, 0.0
    %v696 = vmax.f32 %v691, 0.0
    %v697 = vmax.f32 %v692, 0.0
    %v698 = vmax.f32 %v693, 0.0
    %v699 = vmax.f32 %v694, 0.0
    %v700 = vpack.c.bf16 %v696, %v695
    %v701 = vpack.c.bf16 %v698, %v697
    %v702 = vpack.c.bf16 %v699, %v699
    %v706 = vunpack.c.l.b16 %v700
    %v707 = vunpack.c.h.b16 %v700
    %v708 = vunpack.c.l.b16 %v701
    %v709 = vunpack.c.h.b16 %v701
    %v710 = vunpack.c.l.b16 %v702
    %v711 = vpack.c.b16 %v706, %v706
    %v712 = vpack.c.b16 %v707, %v707
    %v713 = vpack.c.b16 %v708, %v708
    %v714 = vpack.c.b16 %v709, %v709
    %v715 = vpack.c.b16 %v710, %v710
    %v717 = vshrl.u32 %v711, 16
    %v719 = vrot.slane %v717, 7
    %v720 = vshll.u32 %v711, 16
    %v722 = vor.u32 %v719, %v720
    %v723 = vrot.slane %v719, 4
    %v725 = vshrl.u32 %v712, 16
    %v727 = vrot.slane %v725, 7
    %v728 = vshll.u32 %v712, 16
    %v730 = vor.u32 %v727, %v728
    %v731 = vsel %vm48, %v723, %v730
    %v732 = vrot.slane %v727, 4
    %v734 = vshrl.u32 %v713, 16
    %v736 = vrot.slane %v734, 7
    %v737 = vshll.u32 %v713, 16
    %v739 = vor.u32 %v736, %v737
    %v740 = vsel %vm48, %v732, %v739
    %v741 = vrot.slane %v736, 4
    %v743 = vshrl.u32 %v714, 16
    %v745 = vrot.slane %v743, 7
    %v746 = vshll.u32 %v714, 16
    %v748 = vor.u32 %v745, %v746
    %v749 = vsel %vm48, %v741, %v748
    %v750 = vrot.slane %v745, 4
    %v752 = vshll.u32 %v715, 16
    %v754 = vsel %vm48, %v750, %v752
    %v760 = vld [vmem:[#allocation3] sm:$0xf]
    %v761 = vsel %vm70, %v722, %v760
    %762 = vst [vmem:[#allocation3] sm:$0xf] %v761
    %763 = vst.msk [vmem:[#allocation3 + $0x4] sm:$0xf] %vm74, %v731
    %764 = vst.msk [vmem:[#allocation3 + $0x8] sm:$0xf] %vm74, %v740
    %765 = vst.msk [vmem:[#allocation3 + $0xc] sm:$0xf] %vm74, %v749
    %766 = vst.msk [vmem:[#allocation3 + $0x10] sm:$0x1] %vm201, %v754
    %v767 = vld [vmem:[#allocation3] sm:$0x1]
    %v768 = vsel %vm77, 0, %v767
    %769 = vst [vmem:[#allocation3] sm:$0x1] %v768
    %vm770 = vmand %vm76, %vm34
    %v771 = vld [vmem:[#allocation3 + $0x8] sm:$0x1]
    %v772 = vsel %vm770, 0, %v771
    %773 = vst [vmem:[#allocation3 + $0x8] sm:$0x1] %v772
    %vm774 = vcmask 517121
    %vm775 = vmand %vm774, %vm40
    %v776 = vld [vmem:[#allocation3 + $0x10] sm:$0x2]
    %v777 = vsel %vm775, 0, %v776
    %778 = vst [vmem:[#allocation3 + $0x10] sm:$0x2] %v777
    %v779 = vld [vmem:[#allocation3] sm:$0xf]
    %v780 = vld [vmem:[#allocation3 + $0x4] sm:$0xf]
    %v781 = vld [vmem:[#allocation3 + $0x8] sm:$0xf]
    %v782 = vld [vmem:[#allocation3 + $0xc] sm:$0xf]
    %v783 = vld [vmem:[#allocation3 + $0x10] sm:$0x1]
    %v784 = vld [vmem:[%s5] sm:$0xf]
    %v785 = vld [vmem:[%s5 + $0x4] sm:$0xf]
    %v786 = vld [vmem:[%s5 + $0x8] sm:$0xf]
    %v787 = vld [vmem:[%s5 + $0xc] sm:$0xf]
    %v788 = vld [vmem:[%s5 + $0x10] sm:$0xf]
    %v789 = vld [vmem:[%s5 + $0x14] sm:$0xf]
    %v790 = vld [vmem:[%s5 + $0x18] sm:$0xf]
    %v791 = vld [vmem:[%s5 + $0x1c] sm:$0xf]
    %s792 = scalar_lea.vmem %s5, 32
    %v793 = vld [vmem:[%s792] sm:$0xf]
    %v794 = vld [vmem:[%s792 + $0x4] sm:$0xf]
    %v795 = vld [vmem:[%s792 + $0x8] sm:$0xf]
    %v796 = vld [vmem:[%s792 + $0xc] sm:$0xf]
    %v797 = vld [vmem:[%s792 + $0x10] sm:$0xf]
    %v798 = vld [vmem:[%s792 + $0x14] sm:$0xf]
    %v799 = vld [vmem:[%s792 + $0x18] sm:$0xf]
    %v800 = vld [vmem:[%s792 + $0x1c] sm:$0xf]
    %v806 = vunpack.c.l.b16 %v779
    %v807 = vunpack.c.l.b16 %v780
    %v808 = vunpack.c.l.b16 %v781
    %v809 = vunpack.c.l.b16 %v782
    %v810 = vunpack.c.l.b16 %v783
    %v811 = vpack.c.b16 %v807, %v806
    %v812 = vpack.c.b16 %v809, %v808
    %v813 = vpack.c.b16 %v810, %v810
    %v815 = vshrl.u32 %v811, 16
    %v817 = vshll.u32 %v811, 16
    %v819 = vrot.slane %v817, 1
    %v820 = vor.u32 %v815, %v819
    %v822 = vshll.u32 %v812, 16
    %v824 = vrot.slane %v822, 1
    %v825 = vsel %vm327, %v820, %v824
    %v826 = vshrl.u32 %v812, 16
    %v828 = vor.u32 %v826, %v824
    %v830 = vshll.u32 %v813, 16
    %v832 = vrot.slane %v830, 1
    %v833 = vsel %vm327, %v828, %v832
    %v834 = vshrl.u32 %v813, 16
    %v844 = vunpack.c.l.b16 %v793
    %v845 = vunpack.c.l.b16 %v794
    %v846 = vunpack.c.l.b16 %v795
    %v847 = vunpack.c.l.b16 %v796
    %v848 = vunpack.c.l.b16 %v797
    %v849 = vunpack.c.l.b16 %v798
    %v850 = vunpack.c.l.b16 %v799
    %v851 = vunpack.c.l.b16 %v800
    %v852 = vpack.c.b16 %v845, %v844
    %v853 = vpack.c.b16 %v847, %v846
    %v854 = vpack.c.b16 %v849, %v848
    %v855 = vpack.c.b16 %v851, %v850
    %vm860 = vcmask 523264
    %v862 = vsel %vm860, %v825, 0
    %v865 = vsel %vm860, %v833, 0
    %v868 = vsel %vm860, %v834, 0
    %870 = vmatprep.subr.bf16.mxu0 0
    %871 = vmatpush1.bf16.msra.mxu0 0
    %872 = vmatprep.subr.bf16.mxu0 0
    %873 = vmatpush1.bf16.msra.mxu0 0
    %874 = vmatprep.subr.bf16.mxu0 0
    %875 = vmatpush1.bf16.msra.mxu0 0
    %876 = vmatprep.subr.bf16.mxu0 0
    %877 = vmatpush1.bf16.msra.mxu0 0
    %878 = vmatprep.subr.bf16.mxu0 0
    %879 = vmatpush1.bf16.msra.mxu0 %v855
    %880 = vmatprep.subr.bf16.mxu0 0
    %881 = vmatpush1.bf16.msra.mxu0 %v854
    %882 = vmatprep.subr.bf16.mxu0 0
    %883 = vmatpush1.bf16.msra.mxu0 %v853
    %884 = vmatprep.subr.bf16.mxu0 0
    %885 = vmatpush1.bf16.msra.mxu0 %v852
    %886 = vmatprep.subr.bf16.mxu0 0
    %887 = vmatpush2.bf16.msra.mxu0 0
    %888 = vmatprep.subr.bf16.mxu0 0
    %889 = vmatpush2.bf16.msra.mxu0 0
    %890 = vmatprep.subr.bf16.mxu0 0
    %891 = vmatpush2.bf16.msra.mxu0 0
    %892 = vmatprep.subr.bf16.mxu0 0
    %893 = vmatpush2.bf16.msra.mxu0 0
    %894 = vmatprep.subr.bf16.mxu0 0
    %895 = vmatpush2.bf16.msra.mxu0 0
    %896 = vmatprep.subr.bf16.mxu0 0
    %897 = vmatpush2.bf16.msra.mxu0 0
    %898 = vmatprep.subr.bf16.mxu0 0
    %899 = vmatpush2.bf16.msra.mxu0 0
    %900 = vmatprep.subr.bf16.mxu0 0
    %901 = vmatpush2.bf16.msra.mxu0 0
    %902 = vmatprep.mubr.bf16.mxu0 0
    %903 = vmatmul.mubr.bf16.gmra.mxu0 %v862
    %v904 = vpop.f32.mrf.mxu0
    %v905 = vadd.f32 0.0, %v904
    %v906 = vpop.f32.mrf.mxu0
    %v907 = vpop.f32.mrf.mxu0
    %v908 = vadd.f32 0.0, %v907
    %v909 = vpop.f32.mrf.mxu0
    %910 = vmatprep.mubr.bf16.mxu0 0
    %911 = vmatmul.mubr.bf16.gmra.mxu0 %v865
    %v912 = vpop.f32.mrf.mxu0
    %v913 = vadd.f32 0.0, %v912
    %v914 = vpop.f32.mrf.mxu0
    %v915 = vpop.f32.mrf.mxu0
    %v916 = vadd.f32 0.0, %v915
    %v917 = vpop.f32.mrf.mxu0
    %918 = vmatprep.mubr.bf16.mxu0 0
    %919 = vmatmul.mubr.bf16.gmra.mxu0 %v868
    %v920 = vpop.f32.mrf.mxu0
    %v921 = vadd.f32 0.0, %v920
    %v922 = vpop.f32.mrf.mxu0
    %v923 = vpop.f32.mrf.mxu0
    %v924 = vpop.f32.mrf.mxu0
    %925 = vdwg.mxu0
    %v934 = vunpack.c.l.b16 %v784
    %v935 = vunpack.c.l.b16 %v785
    %v936 = vunpack.c.l.b16 %v786
    %v937 = vunpack.c.l.b16 %v787
    %v938 = vunpack.c.l.b16 %v788
    %v939 = vunpack.c.l.b16 %v789
    %v940 = vunpack.c.l.b16 %v790
    %v941 = vunpack.c.l.b16 %v791
    %v942 = vpack.c.b16 %v935, %v934
    %v943 = vpack.c.b16 %v937, %v936
    %v944 = vpack.c.b16 %v939, %v938
    %v945 = vpack.c.b16 %v941, %v940
    %v950 = vsel %vm860, %v811, 0
    %v952 = vsel %vm860, %v812, 0
    %v954 = vsel %vm860, %v813, 0
    %956 = vmatprep.subr.bf16.mxu0 0
    %957 = vmatpush1.bf16.msra.mxu0 0
    %958 = vmatprep.subr.bf16.mxu0 0
    %959 = vmatpush1.bf16.msra.mxu0 0
    %960 = vmatprep.subr.bf16.mxu0 0
    %961 = vmatpush1.bf16.msra.mxu0 0
    %962 = vmatprep.subr.bf16.mxu0 0
    %963 = vmatpush1.bf16.msra.mxu0 0
    %964 = vmatprep.subr.bf16.mxu0 0
    %965 = vmatpush1.bf16.msra.mxu0 %v945
    %966 = vmatprep.subr.bf16.mxu0 0
    %967 = vmatpush1.bf16.msra.mxu0 %v944
    %968 = vmatprep.subr.bf16.mxu0 0
    %969 = vmatpush1.bf16.msra.mxu0 %v943
    %970 = vmatprep.subr.bf16.mxu0 0
    %971 = vmatpush1.bf16.msra.mxu0 %v942
    %972 = vmatprep.subr.bf16.mxu0 0
    %973 = vmatpush2.bf16.msra.mxu0 0
    %974 = vmatprep.subr.bf16.mxu0 0
    %975 = vmatpush2.bf16.msra.mxu0 0
    %976 = vmatprep.subr.bf16.mxu0 0
    %977 = vmatpush2.bf16.msra.mxu0 0
    %978 = vmatprep.subr.bf16.mxu0 0
    %979 = vmatpush2.bf16.msra.mxu0 0
    %980 = vmatprep.subr.bf16.mxu0 0
    %981 = vmatpush2.bf16.msra.mxu0 0
    %982 = vmatprep.subr.bf16.mxu0 0
    %983 = vmatpush2.bf16.msra.mxu0 0
    %984 = vmatprep.subr.bf16.mxu0 0
    %985 = vmatpush2.bf16.msra.mxu0 0
    %986 = vmatprep.subr.bf16.mxu0 0
    %987 = vmatpush2.bf16.msra.mxu0 0
    %988 = vmatprep.mubr.bf16.mxu0 0
    %989 = vmatmul.mubr.bf16.gmra.mxu0 %v950
    %v990 = vpop.f32.mrf.mxu0
    %v991 = vadd.f32 %v905, %v990
    %v992 = vpop.f32.mrf.mxu0
    %v993 = vpop.f32.mrf.mxu0
    %v994 = vadd.f32 %v908, %v993
    %v995 = vpop.f32.mrf.mxu0
    %996 = vmatprep.mubr.bf16.mxu0 0
    %997 = vmatmul.mubr.bf16.gmra.mxu0 %v952
    %v998 = vpop.f32.mrf.mxu0
    %v999 = vadd.f32 %v913, %v998
    %v1000 = vpop.f32.mrf.mxu0
    %v1001 = vpop.f32.mrf.mxu0
    %v1002 = vadd.f32 %v916, %v1001
    %v1003 = vpop.f32.mrf.mxu0
    %1004 = vmatprep.mubr.bf16.mxu0 0
    %1005 = vmatmul.mubr.bf16.gmra.mxu0 %v954
    %v1006 = vpop.f32.mrf.mxu0
    %v1007 = vadd.f32 %v921, %v1006
    %v1008 = vpop.f32.mrf.mxu0
    %v1009 = vpop.f32.mrf.mxu0
    %v1010 = vpop.f32.mrf.mxu0
    %1011 = vdwg.mxu0
    %v1012 = vld [vmem:[#allocation3] sm:$0xe]
    %v1013 = vld [vmem:[#allocation3 + $0x10] sm:$0x3]
    %s1014 = scalar_lea.vmem %s5, 64
    %v1015 = vld [vmem:[%s1014] sm:$0xf]
    %v1016 = vld [vmem:[%s1014 + $0x4] sm:$0xf]
    %v1017 = vld [vmem:[%s1014 + $0x8] sm:$0xf]
    %v1018 = vld [vmem:[%s1014 + $0xc] sm:$0xf]
    %v1019 = vld [vmem:[%s1014 + $0x10] sm:$0xf]
    %v1020 = vld [vmem:[%s1014 + $0x14] sm:$0xf]
    %v1021 = vld [vmem:[%s1014 + $0x18] sm:$0xf]
    %v1022 = vld [vmem:[%s1014 + $0x1c] sm:$0xf]
    %v1025 = vunpack.c.l.b16 %v1012
    %v1026 = vunpack.c.l.b16 %v1013
    %v1027 = vpack.c.b16 %v807, %v1025
    %v1028 = vpack.c.b16 %v1026, %v1026
    %v1029 = vrot.slane %v1027, 1
    %v1030 = vrot.slane %v812, 1
    %v1031 = vsel %vm571, %v1029, %v1030
    %v1032 = vrot.slane %v1028, 1
    %v1033 = vsel %vm571, %v1030, %v1032
    %v1042 = vunpack.c.l.b16 %v1015
    %v1043 = vunpack.c.l.b16 %v1016
    %v1044 = vunpack.c.l.b16 %v1017
    %v1045 = vunpack.c.l.b16 %v1018
    %v1046 = vunpack.c.l.b16 %v1019
    %v1047 = vunpack.c.l.b16 %v1020
    %v1048 = vunpack.c.l.b16 %v1021
    %v1049 = vunpack.c.l.b16 %v1022
    %v1050 = vpack.c.b16 %v1043, %v1042
    %v1051 = vpack.c.b16 %v1045, %v1044
    %v1052 = vpack.c.b16 %v1047, %v1046
    %v1053 = vpack.c.b16 %v1049, %v1048
    %v1059 = vsel %vm860, %v1031, 0
    %v1062 = vsel %vm860, %v1033, 0
    %v1065 = vsel %vm860, %v1032, 0
    %1067 = vmatprep.subr.bf16.mxu0 0
    %1068 = vmatpush1.bf16.msra.mxu0 0
    %1069 = vmatprep.subr.bf16.mxu0 0
    %1070 = vmatpush1.bf16.msra.mxu0 0
    %1071 = vmatprep.subr.bf16.mxu0 0
    %1072 = vmatpush1.bf16.msra.mxu0 0
    %1073 = vmatprep.subr.bf16.mxu0 0
    %1074 = vmatpush1.bf16.msra.mxu0 0
    %1075 = vmatprep.subr.bf16.mxu0 0
    %1076 = vmatpush1.bf16.msra.mxu0 %v1053
    %1077 = vmatprep.subr.bf16.mxu0 0
    %1078 = vmatpush1.bf16.msra.mxu0 %v1052
    %1079 = vmatprep.subr.bf16.mxu0 0
    %1080 = vmatpush1.bf16.msra.mxu0 %v1051
    %1081 = vmatprep.subr.bf16.mxu0 0
    %1082 = vmatpush1.bf16.msra.mxu0 %v1050
    %1083 = vmatprep.subr.bf16.mxu0 0
    %1084 = vmatpush2.bf16.msra.mxu0 0
    %1085 = vmatprep.subr.bf16.mxu0 0
    %1086 = vmatpush2.bf16.msra.mxu0 0
    %1087 = vmatprep.subr.bf16.mxu0 0
    %1088 = vmatpush2.bf16.msra.mxu0 0
    %1089 = vmatprep.subr.bf16.mxu0 0
    %1090 = vmatpush2.bf16.msra.mxu0 0
    %1091 = vmatprep.subr.bf16.mxu0 0
    %1092 = vmatpush2.bf16.msra.mxu0 0
    %1093 = vmatprep.subr.bf16.mxu0 0
    %1094 = vmatpush2.bf16.msra.mxu0 0
    %1095 = vmatprep.subr.bf16.mxu0 0
    %1096 = vmatpush2.bf16.msra.mxu0 0
    %1097 = vmatprep.subr.bf16.mxu0 0
    %1098 = vmatpush2.bf16.msra.mxu0 0
    %1099 = vmatprep.mubr.bf16.mxu0 0
    %1100 = vmatmul.mubr.bf16.gmra.mxu0 %v1059
    %v1101 = vpop.f32.mrf.mxu0
    %v1102 = vadd.f32 0.0, %v1101
    %v1103 = vpop.f32.mrf.mxu0
    %v1104 = vpop.f32.mrf.mxu0
    %v1105 = vadd.f32 0.0, %v1104
    %v1106 = vpop.f32.mrf.mxu0
    %1107 = vmatprep.mubr.bf16.mxu0 0
    %1108 = vmatmul.mubr.bf16.gmra.mxu0 %v1062
    %v1109 = vpop.f32.mrf.mxu0
    %v1110 = vadd.f32 0.0, %v1109
    %v1111 = vpop.f32.mrf.mxu0
    %v1112 = vpop.f32.mrf.mxu0
    %v1113 = vadd.f32 0.0, %v1112
    %v1114 = vpop.f32.mrf.mxu0
    %1115 = vmatprep.mubr.bf16.mxu0 0
    %1116 = vmatmul.mubr.bf16.gmra.mxu0 %v1065
    %v1117 = vpop.f32.mrf.mxu0
    %v1118 = vadd.f32 0.0, %v1117
    %v1119 = vpop.f32.mrf.mxu0
    %v1120 = vpop.f32.mrf.mxu0
    %v1121 = vpop.f32.mrf.mxu0
    %1122 = vdwg.mxu0
    %v1123 = vadd.f32 %v991, %v1102
    %v1124 = vadd.f32 %v994, %v1105
    %v1125 = vadd.f32 %v999, %v1110
    %v1126 = vadd.f32 %v1002, %v1113
    %v1127 = vadd.f32 %v1007, %v1118
    %v1128 = vld [vmem:[%s6] sm:$0x1]
    %v1130 = vlaneseq
    %v1131 = vshrl.u32 %v1130, 7
    %v1132 = vsub.s32 0, %v1131
    %v1133 = vrot.slane %v1128, %v1132
    %v1135 = vadd.f32 %v1123, %v1133
    %v1136 = vadd.f32 %v1124, %v1133
    %v1137 = vadd.f32 %v1125, %v1133
    %v1138 = vadd.f32 %v1126, %v1133
    %v1139 = vadd.f32 %v1127, %v1133
    %v1140 = vmax.f32 %v1135, 0.0
    %v1141 = vmax.f32 %v1136, 0.0
    %v1142 = vmax.f32 %v1137, 0.0
    %v1143 = vmax.f32 %v1138, 0.0
    %v1144 = vmax.f32 %v1139, 0.0
    %1145 = vst.msk [vmem:[#allocation4] sm:$0xff] %vm860, %v1140
    %1146 = vst.msk [vmem:[#allocation4 + $0x8] sm:$0xff] %vm860, %v1141
    %s1147 = scalar_lea.vmem [#allocation4], 16
    %vm1148 = vcmask 523265
    %1149 = vst.msk [vmem:[%s1147 - $0x1] sm:$0xfe] %vm1148, %v1142
    %1150 = vst.msk [vmem:[%s1147 + $0x7] sm:$0xff] %vm860, %v1143
    %1151 = vst.msk [vmem:[%s1147 + $0xf] sm:$0x1] %vm201, %v1144
    // Predicated region
    $region30: #{tpu_custom_call.1} parent=1 // pred_check
      _
    $region31: #{tpu_custom_call.1} parent=1 // pred_check_branch
      %1153 = sbr.rel (0) target = $region33
    $region32: #{tpu_custom_call.1} parent=1 // pred_region
      %s1155 = ssub.s32 512, 512
      %1156 = vsyncadd [#allocation5], %s1155
      %s1157 = sshll.u32 [#allocation4], 4
      %s1158 = int_to_ptr.vmem [resolvable:$true] %s1157
      %1163 = dma.vmem_to_hbm [thread:$0]  %s1158, 512, %s7, [#allocation5], 128, 128, 8
    $region33: #{tpu_custom_call.1} parent=1 // pred_fallthru
      _
    // Predicated region
    $region34: #{tpu_custom_call.1} parent=1 // pred_check
      _
    $region35: #{tpu_custom_call.1} parent=1 // pred_check_branch
      %1165 = sbr.rel (0) target = $region37
    $region36: #{tpu_custom_call.1} parent=1 // pred_region
      %1166 = dma.done [#allocation5], 512
    $region37: #{tpu_custom_call.1} parent=1 // pred_fallthru
      _
    %1167 = vsyncpa [#allocation5], 1

</llo_original>
